<compile_context>
chip_gen: v5e
topology: v5e:2x2
jax: 0.10.0
libtpu: 0.0.40
codegen_flags: <defaults>
</compile_context>

<pallas_src>
import math
from functools import partial

import jax
import jax.numpy as jnp
import numpy as np
from jax.experimental import pallas as pl
from jax.experimental.pallas import tpu as pltpu

NEG_SLOPE = 0.01      # nn.LeakyReLU() default negative_slope
LANE = 128            # TPU lane width -> lane-dense channel padding


def _round_up(x, m):
    return ((x + m - 1) // m) * m


def _invariant_spec(shape):
    """BlockSpec for a grid-invariant input; single-buffered when supported."""
    index_map = lambda n: (0,) * len(shape)
    if hasattr(pl, "Buffered"):
        try:
            return pl.BlockSpec(shape, index_map, pipeline_mode=pl.Buffered(1))
        except TypeError:
            pass
    return pl.BlockSpec(shape, index_map)


# --------------------------- fused Pallas kernel ---------------------------- #
def _make_fused_kernel(n_layers, tap_nonzero, compute_dtype):
    """Straight-line kernel: one matmul per conv layer (+9 tiny selection dots
    per layer >= 1) plus the EqualLinear matmul.  All activations live as f32
    values in vregs; no inter-layer scratch, no per-row loops."""
    cdt = compute_dtype

    def kernel(*refs):
        p0_ref, w0_ref, b0_ref = refs[0], refs[1], refs[2]
        pos = 3
        layers = []
        for _ in range(n_layers - 1):
            layers.append(refs[pos:pos + 3])       # (sel, w, b)
            pos += 3
        lin_w_ref, lin_b_ref, out_ref = refs[pos], refs[pos + 1], refs[pos + 2]

        # ---- layer 0: one (B_blk*Ho*Wo, 9*in_c_pad) @ (9*in_c_pad, c_pad) ----
        acc = jnp.dot(p0_ref[0], w0_ref[...], preferred_element_type=jnp.float32)
        acc = acc + b0_ref[...]
        y = jnp.where(acc >= 0.0, acc, NEG_SLOPE * acc)          # f32

        # ---- layers 1..L-1: selection-gather im2col + one deep-K matmul ----
        for l, (sel_ref, w_ref, b_ref) in enumerate(layers, start=1):
            yc = y.astype(cdt)
            m_out = sel_ref.shape[1]
            c_in = yc.shape[1]
            blocks = []
            for t in range(9):
                if tap_nonzero[l][t]:
                    tap = jnp.dot(sel_ref[t], yc,
                                  preferred_element_type=jnp.float32)
                    blocks.append(tap.astype(cdt))
                else:                                # tap entirely in padding
                    blocks.append(jnp.zeros((m_out, c_in), cdt))
            patch = jnp.concatenate(blocks, axis=1)  # (m_out, 9*c_pad)
            acc = jnp.dot(patch, w_ref[...], preferred_element_type=jnp.float32)
            acc = acc + b_ref[...]
            y = jnp.where(acc >= 0.0, acc, NEG_SLOPE * acc)

        # ---- EqualLinear (scale / lr_mul folded & pre-transposed by wrapper) ----
        out = jnp.dot(y.astype(cdt), lin_w_ref[...],
                      preferred_element_type=jnp.float32)
        out_ref[:, 0, :] = (out + lin_b_ref[...]).astype(out_ref.dtype)

    return kernel


# ------------------------------- wrapper ------------------------------------ #
@partial(jax.jit, static_argnames=("out_c", "compute_dtype", "batch_block"))
def gradual_style_block_pallas(x_nchw, convs, lin_w, lin_b, out_c,
                               compute_dtype=jnp.float32, batch_block=1):
    """Fused Pallas forward of GradualStyleBlock."""
    N, in_c, H, W = x_nchw.shape
    n_layers = len(convs)
    if H != W or H != 2 ** n_layers:
        raise ValueError("spatial must be a power of two collapsing to 1x1")
    if N % batch_block != 0:
        raise ValueError("batch must be divisible by batch_block")
    num_blocks = N // batch_block
    cdt = compute_dtype
    c_pad = _round_up(max(out_c, LANE), LANE)          # lane-dense channels

    # ---- layer-0 im2col in the wrapper (tiny: Ho*Wo x 9*in_c per sample) ----
    Ho, Wo = H // 2, W // 2
    M0 = Ho * Wo
    K0 = 9 * in_c
    K0p = _round_up(K0, LANE)
    x = jnp.transpose(x_nchw, (0, 2, 3, 1)).astype(jnp.float32)      # NHWC
    xp = jnp.pad(x, ((0, 0), (1, 1), (1, 1), (0, 0)))
    taps = [xp[:, kh:kh + H:2, kw:kw + W:2, :]
            for kh in range(3) for kw in range(3)]                   # (N,Ho,Wo,in_c)
    patch0 = jnp.concatenate(taps, axis=-1).reshape(N, M0, K0)
    patch0 = jnp.pad(patch0, ((0, 0), (0, 0), (0, K0p - K0)))
    patch0 = patch0.reshape(num_blocks, batch_block * M0, K0p).astype(cdt)

    # ---- layer-0 weight/bias: rows ordered (kh*3+kw)*in_c + cin ----
    w0, b0 = convs[0]
    w0p = jnp.transpose(w0, (2, 3, 1, 0)).reshape(K0, out_c)
    w0p = jnp.pad(w0p, ((0, K0p - K0), (0, c_pad - out_c))).astype(cdt)
    b0p = jnp.pad(b0, (0, c_pad - out_c)).reshape(1, c_pad).astype(jnp.float32)

    # ---- layers >= 1: packed weights + wrapper-built selection matrices ----
    layer_inputs = []              # flat (sel, w, b) per layer
    tap_nonzero = [None]           # static per-layer tap masks (layer 0 unused)
    s_in = Ho
    for l in range(1, n_layers):
        s_out = s_in // 2
        w, b = convs[l]
        wt = jnp.transpose(w, (2, 3, 1, 0)).reshape(9, out_c, out_c)
        wp = jnp.zeros((9, c_pad, c_pad), jnp.float32)
        wp = wp.at[:, :out_c, :out_c].set(wt)
        wp = wp.reshape(9 * c_pad, c_pad).astype(cdt)
        bp = jnp.pad(b, (0, c_pad - out_c)).reshape(1, c_pad).astype(jnp.float32)

        # 0/1 im2col gather matrices (stride 2, pad 1); zero rows = padding.
        sel = np.zeros((9, s_out * s_out, s_in * s_in), np.float32)
        for kh in range(3):
            for kw in range(3):
                t = kh * 3 + kw
                for i in range(s_out):
                    for j in range(s_out):
                        r, c = 2 * i + kh - 1, 2 * j + kw - 1
                        if 0 <= r < s_in and 0 <= c < s_in:
                            sel[t, i * s_out + j, r * s_in + c] = 1.0
        tap_nonzero.append(tuple(bool(sel[t].any()) for t in range(9)))
        if batch_block > 1:        # fold batch into M: block-diagonal selection
            eye = np.eye(batch_block, dtype=np.float32)
            sel = np.stack([np.kron(eye, sel[t]) for t in range(9)])
        layer_inputs.append((jnp.asarray(sel, dtype=cdt), wp, bp))
        s_in = s_out

    # ---- EqualLinear (lr_mul=1): fold scale into W, lr_mul into b, transpose ----
    lr_mul = 1.0
    out_dim, in_dim = lin_w.shape
    scale = (1.0 / math.sqrt(in_dim)) * lr_mul
    w_eff = jnp.transpose(lin_w * scale)
    w_eff = jnp.pad(w_eff, ((0, c_pad - in_dim), (0, c_pad - out_dim))).astype(cdt)
    b_eff = jnp.pad(lin_b * lr_mul, (0, c_pad - out_dim)) \
        .reshape(1, c_pad).astype(jnp.float32)

    # ---- specs (inputs and specs built in lockstep) ----
    in_arrays = [patch0, w0p, b0p]
    in_specs = [pl.BlockSpec((1, batch_block * M0, K0p), lambda n: (n, 0, 0)),
                _invariant_spec(w0p.shape), _invariant_spec(b0p.shape)]
    for (sel, wp, bp) in layer_inputs:
        in_arrays += [sel, wp, bp]
        in_specs += [_invariant_spec(sel.shape), _invariant_spec(wp.shape),
                     _invariant_spec(bp.shape)]
    in_arrays += [w_eff, b_eff]
    in_specs += [_invariant_spec(w_eff.shape), _invariant_spec(b_eff.shape)]

    fused = pl.pallas_call(
        _make_fused_kernel(n_layers, tap_nonzero, cdt),
        out_shape=jax.ShapeDtypeStruct((N, 1, c_pad), jnp.float32),
        grid_spec=pltpu.PrefetchScalarGridSpec(
            num_scalar_prefetch=0,
            grid=(num_blocks,),
            in_specs=in_specs,
            out_specs=pl.BlockSpec((batch_block, 1, c_pad), lambda n: (n, 0, 0))),
        compiler_params=pltpu.CompilerParams(
            dimension_semantics=("parallel",),      # v7x: blocks split across TCs
            vmem_limit_bytes=32 * 1024 * 1024),
    )
    out = fused(*in_arrays)
    return out.reshape(N, c_pad)[:, :out_c]


# --------------------------- pure-JAX reference ----------------------------- #
def gradual_style_block_ref(x_nchw, convs, lin_w, lin_b, out_c, lr_mul=1.0):
    y = x_nchw.astype(jnp.float32)
    for (w, b) in convs:
        y = jax.lax.conv_general_dilated(
            y, w, window_strides=(2, 2), padding=((1, 1), (1, 1)),
            dimension_numbers=("NCHW", "OIHW", "NCHW"))
        y = y + b[None, :, None, None]
        y = jnp.where(y >= 0, y, NEG_SLOPE * y)
    y = y.reshape(-1, out_c)
    scale = (1.0 / math.sqrt(lin_w.shape[1])) * lr_mul
    return y @ (lin_w * scale).T + lin_b * lr_mul


# --------------------------- parameter init --------------------------------- #
def init_params(key, in_c, out_c, spatial):
    num_pools = int(np.log2(spatial))
    convs = []
    cin = in_c
    for _ in range(num_pools):
        key, kw, kb = jax.random.split(key, 3)
        w = jax.random.normal(kw, (out_c, cin, 3, 3), jnp.float32) * 0.1
        b = jax.random.normal(kb, (out_c,), jnp.float32) * 0.1
        convs.append((w, b))
        cin = out_c
    key, kl = jax.random.split(key)
    # EqualLinear(out_c, out_c, lr_mul=1): weight ~ randn(out, in)/lr_mul, bias 0
    lin_w = jax.random.normal(kl, (out_c, out_c), jnp.float32)
    lin_b = jnp.zeros((out_c,), jnp.float32)
    return convs, lin_w, lin_b


if __name__ == "__main__":
    in_c, out_c, spatial = 4, 32, 16   # num_pools = log2(16) = 4 conv layers
    key = jax.random.PRNGKey(0)

    # ---- N=2, batch_block=1: grid of 2 keeps both v7x TensorCores busy ----
    N = 2
    key, kx = jax.random.split(key)
    x = jax.random.normal(kx, (N, in_c, spatial, spatial), jnp.float32)  # NCHW
    convs, lin_w, lin_b = init_params(key, in_c, out_c, spatial)
    ref = gradual_style_block_ref(x, convs, lin_w, lin_b, out_c)

    out = gradual_style_block_pallas(x, convs, lin_w, lin_b, out_c=out_c,
                                     compute_dtype=jnp.float32, batch_block=1)
    out = jax.block_until_ready(out)
    assert out.shape == (N, out_c), out.shape
    np.testing.assert_allclose(np.asarray(out), np.asarray(ref),
                               rtol=2e-4, atol=2e-4)

    # bf16 MXU path (production default on v5e/v6e/v7x), f32 accumulation
    # and f32 inter-layer activations: loose check.
    out_bf16 = gradual_style_block_pallas(x, convs, lin_w, lin_b, out_c=out_c,
                                          compute_dtype=jnp.bfloat16,
                                          batch_block=1)
    out_bf16 = jax.block_until_ready(out_bf16)
    np.testing.assert_allclose(np.asarray(out_bf16), np.asarray(ref),
                               rtol=5e-2, atol=5e-2)

    # ---- N=4, batch_block=2: batch folded into the matmul M dimension ----
    N2 = 4
    key, kx2 = jax.random.split(key)
    x2 = jax.random.normal(kx2, (N2, in_c, spatial, spatial), jnp.float32)
    ref2 = gradual_style_block_ref(x2, convs, lin_w, lin_b, out_c)
    out2 = gradual_style_block_pallas(x2, convs, lin_w, lin_b, out_c=out_c,
                                      compute_dtype=jnp.float32, batch_block=2)
    out2 = jax.block_until_ready(out2)
    np.testing.assert_allclose(np.asarray(out2), np.asarray(ref2),
                               rtol=2e-4, atol=2e-4)

    print("KERNEL_OK")
</pallas_src>

<mosaic_0001>
module attributes {stable_mosaic.version = 11 : i64} {
  func.func @kernel(%arg0: i32, %arg1: memref<1x64x128xf32, #tpu.memory_space<vmem>>, %arg2: memref<128x128xf32, #tpu.memory_space<vmem>>, %arg3: memref<1x128xf32, #tpu.memory_space<vmem>>, %arg4: memref<9x16x64xf32, #tpu.memory_space<vmem>>, %arg5: memref<1152x128xf32, #tpu.memory_space<vmem>>, %arg6: memref<1x128xf32, #tpu.memory_space<vmem>>, %arg7: memref<9x4x16xf32, #tpu.memory_space<vmem>>, %arg8: memref<1152x128xf32, #tpu.memory_space<vmem>>, %arg9: memref<1x128xf32, #tpu.memory_space<vmem>>, %arg10: memref<9x1x4xf32, #tpu.memory_space<vmem>>, %arg11: memref<1152x128xf32, #tpu.memory_space<vmem>>, %arg12: memref<1x128xf32, #tpu.memory_space<vmem>>, %arg13: memref<128x128xf32, #tpu.memory_space<vmem>>, %arg14: memref<1x128xf32, #tpu.memory_space<vmem>>, %arg15: memref<1x1x128xf32, #tpu.memory_space<vmem>>) attributes {dimension_semantics = [#tpu.dimension_semantics<parallel>], iteration_bounds = array<i64: 2>, scalar_prefetch = 0 : i64, scratch_operands = 0 : i64, tpu.core_type = #tpu.core_type<tc>, window_params = [{transform_indices = @transform_0, window_bounds = array<i64: 1, 64, 128>}, {pipeline_mode = #tpu.pipeline_mode<synchronous>, transform_indices = @transform_1, window_bounds = array<i64: 128, 128>}, {pipeline_mode = #tpu.pipeline_mode<synchronous>, transform_indices = @transform_2, window_bounds = array<i64: 1, 128>}, {pipeline_mode = #tpu.pipeline_mode<synchronous>, transform_indices = @transform_3, window_bounds = array<i64: 9, 16, 64>}, {pipeline_mode = #tpu.pipeline_mode<synchronous>, transform_indices = @transform_4, window_bounds = array<i64: 1152, 128>}, {pipeline_mode = #tpu.pipeline_mode<synchronous>, transform_indices = @transform_5, window_bounds = array<i64: 1, 128>}, {pipeline_mode = #tpu.pipeline_mode<synchronous>, transform_indices = @transform_6, window_bounds = array<i64: 9, 4, 16>}, {pipeline_mode = #tpu.pipeline_mode<synchronous>, transform_indices = @transform_7, window_bounds = array<i64: 1152, 128>}, {pipeline_mode = #tpu.pipeline_mode<synchronous>, transform_indices = @transform_8, window_bounds = array<i64: 1, 128>}, {pipeline_mode = #tpu.pipeline_mode<synchronous>, transform_indices = @transform_9, window_bounds = array<i64: 9, 1, 4>}, {pipeline_mode = #tpu.pipeline_mode<synchronous>, transform_indices = @transform_10, window_bounds = array<i64: 1152, 128>}, {pipeline_mode = #tpu.pipeline_mode<synchronous>, transform_indices = @transform_11, window_bounds = array<i64: 1, 128>}, {pipeline_mode = #tpu.pipeline_mode<synchronous>, transform_indices = @transform_12, window_bounds = array<i64: 128, 128>}, {pipeline_mode = #tpu.pipeline_mode<synchronous>, transform_indices = @transform_13, window_bounds = array<i64: 1, 128>}, {transform_indices = @transform_14, window_bounds = array<i64: 1, 1, 128>}]} {
    %c0 = arith.constant 0 : index
    %c0_0 = arith.constant 0 : index
    %c0_1 = arith.constant 0 : index
    %0 = vector.load %arg1[%c0, %c0_0, %c0_1] : memref<1x64x128xf32, #tpu.memory_space<vmem>>, vector<1x64x128xf32>
    %1 = vector.shape_cast %0 : vector<1x64x128xf32> to vector<64x128xf32>
    %c0_2 = arith.constant 0 : index
    %c0_3 = arith.constant 0 : index
    %2 = vector.load %arg2[%c0_2, %c0_3] : memref<128x128xf32, #tpu.memory_space<vmem>>, vector<128x128xf32>
    %cst = arith.constant dense<0.000000e+00> : vector<64x128xf32>
    %3 = tpu.matmul %1, %2, %cst {dimension_numbers = #tpu.dot_dimension_numbers<[1], [0], [0], [1], [0, 0, 1, 1], [], []>} : vector<64x128xf32>, vector<128x128xf32>, vector<64x128xf32> -> vector<64x128xf32>
    %c0_4 = arith.constant 0 : index
    %c0_5 = arith.constant 0 : index
    %4 = vector.load %arg3[%c0_4, %c0_5] : memref<1x128xf32, #tpu.memory_space<vmem>>, vector<1x128xf32>
    %5 = vector.broadcast %4 : vector<1x128xf32> to vector<64x128xf32>
    %6 = arith.addf %3, %5 : vector<64x128xf32>
    %cst_6 = arith.constant 0.000000e+00 : f32
    %7 = vector.broadcast %cst_6 : f32 to vector<64x128xf32>
    %8 = arith.cmpf oge, %6, %7 : vector<64x128xf32>
    %cst_7 = arith.constant 0.00999999977 : f32
    %9 = vector.broadcast %cst_7 : f32 to vector<64x128xf32>
    %10 = arith.mulf %9, %6 : vector<64x128xf32>
    %11 = arith.select %8, %6, %10 : vector<64x128xi1>, vector<64x128xf32>
    %c0_8 = arith.constant 0 : index
    %c0_9 = arith.constant 0 : index
    %c0_10 = arith.constant 0 : index
    %12 = vector.load %arg4[%c0_8, %c0_9, %c0_10] : memref<9x16x64xf32, #tpu.memory_space<vmem>>, vector<1x16x64xf32>
    %13 = vector.shape_cast %12 : vector<1x16x64xf32> to vector<16x64xf32>
    %cst_11 = arith.constant dense<0.000000e+00> : vector<16x128xf32>
    %14 = tpu.matmul %13, %11, %cst_11 {dimension_numbers = #tpu.dot_dimension_numbers<[1], [0], [0], [1], [0, 0, 1, 1], [], []>} : vector<16x64xf32>, vector<64x128xf32>, vector<16x128xf32> -> vector<16x128xf32>
    %c1 = arith.constant 1 : index
    %c0_12 = arith.constant 0 : index
    %c0_13 = arith.constant 0 : index
    %15 = vector.load %arg4[%c1, %c0_12, %c0_13] : memref<9x16x64xf32, #tpu.memory_space<vmem>>, vector<1x16x64xf32>
    %16 = vector.shape_cast %15 : vector<1x16x64xf32> to vector<16x64xf32>
    %cst_14 = arith.constant dense<0.000000e+00> : vector<16x128xf32>
    %17 = tpu.matmul %16, %11, %cst_14 {dimension_numbers = #tpu.dot_dimension_numbers<[1], [0], [0], [1], [0, 0, 1, 1], [], []>} : vector<16x64xf32>, vector<64x128xf32>, vector<16x128xf32> -> vector<16x128xf32>
    %c2 = arith.constant 2 : index
    %c0_15 = arith.constant 0 : index
    %c0_16 = arith.constant 0 : index
    %18 = vector.load %arg4[%c2, %c0_15, %c0_16] : memref<9x16x64xf32, #tpu.memory_space<vmem>>, vector<1x16x64xf32>
    %19 = vector.shape_cast %18 : vector<1x16x64xf32> to vector<16x64xf32>
    %cst_17 = arith.constant dense<0.000000e+00> : vector<16x128xf32>
    %20 = tpu.matmul %19, %11, %cst_17 {dimension_numbers = #tpu.dot_dimension_numbers<[1], [0], [0], [1], [0, 0, 1, 1], [], []>} : vector<16x64xf32>, vector<64x128xf32>, vector<16x128xf32> -> vector<16x128xf32>
    %c3 = arith.constant 3 : index
    %c0_18 = arith.constant 0 : index
    %c0_19 = arith.constant 0 : index
    %21 = vector.load %arg4[%c3, %c0_18, %c0_19] : memref<9x16x64xf32, #tpu.memory_space<vmem>>, vector<1x16x64xf32>
    %22 = vector.shape_cast %21 : vector<1x16x64xf32> to vector<16x64xf32>
    %cst_20 = arith.constant dense<0.000000e+00> : vector<16x128xf32>
    %23 = tpu.matmul %22, %11, %cst_20 {dimension_numbers = #tpu.dot_dimension_numbers<[1], [0], [0], [1], [0, 0, 1, 1], [], []>} : vector<16x64xf32>, vector<64x128xf32>, vector<16x128xf32> -> vector<16x128xf32>
    %c4 = arith.constant 4 : index
    %c0_21 = arith.constant 0 : index
    %c0_22 = arith.constant 0 : index
    %24 = vector.load %arg4[%c4, %c0_21, %c0_22] : memref<9x16x64xf32, #tpu.memory_space<vmem>>, vector<1x16x64xf32>
    %25 = vector.shape_cast %24 : vector<1x16x64xf32> to vector<16x64xf32>
    %cst_23 = arith.constant dense<0.000000e+00> : vector<16x128xf32>
    %26 = tpu.matmul %25, %11, %cst_23 {dimension_numbers = #tpu.dot_dimension_numbers<[1], [0], [0], [1], [0, 0, 1, 1], [], []>} : vector<16x64xf32>, vector<64x128xf32>, vector<16x128xf32> -> vector<16x128xf32>
    %c5 = arith.constant 5 : index
    %c0_24 = arith.constant 0 : index
    %c0_25 = arith.constant 0 : index
    %27 = vector.load %arg4[%c5, %c0_24, %c0_25] : memref<9x16x64xf32, #tpu.memory_space<vmem>>, vector<1x16x64xf32>
    %28 = vector.shape_cast %27 : vector<1x16x64xf32> to vector<16x64xf32>
    %cst_26 = arith.constant dense<0.000000e+00> : vector<16x128xf32>
    %29 = tpu.matmul %28, %11, %cst_26 {dimension_numbers = #tpu.dot_dimension_numbers<[1], [0], [0], [1], [0, 0, 1, 1], [], []>} : vector<16x64xf32>, vector<64x128xf32>, vector<16x128xf32> -> vector<16x128xf32>
    %c6 = arith.constant 6 : index
    %c0_27 = arith.constant 0 : index
    %c0_28 = arith.constant 0 : index
    %30 = vector.load %arg4[%c6, %c0_27, %c0_28] : memref<9x16x64xf32, #tpu.memory_space<vmem>>, vector<1x16x64xf32>
    %31 = vector.shape_cast %30 : vector<1x16x64xf32> to vector<16x64xf32>
    %cst_29 = arith.constant dense<0.000000e+00> : vector<16x128xf32>
    %32 = tpu.matmul %31, %11, %cst_29 {dimension_numbers = #tpu.dot_dimension_numbers<[1], [0], [0], [1], [0, 0, 1, 1], [], []>} : vector<16x64xf32>, vector<64x128xf32>, vector<16x128xf32> -> vector<16x128xf32>
    %c7 = arith.constant 7 : index
    %c0_30 = arith.constant 0 : index
    %c0_31 = arith.constant 0 : index
    %33 = vector.load %arg4[%c7, %c0_30, %c0_31] : memref<9x16x64xf32, #tpu.memory_space<vmem>>, vector<1x16x64xf32>
    %34 = vector.shape_cast %33 : vector<1x16x64xf32> to vector<16x64xf32>
    %cst_32 = arith.constant dense<0.000000e+00> : vector<16x128xf32>
    %35 = tpu.matmul %34, %11, %cst_32 {dimension_numbers = #tpu.dot_dimension_numbers<[1], [0], [0], [1], [0, 0, 1, 1], [], []>} : vector<16x64xf32>, vector<64x128xf32>, vector<16x128xf32> -> vector<16x128xf32>
    %c8 = arith.constant 8 : index
    %c0_33 = arith.constant 0 : index
    %c0_34 = arith.constant 0 : index
    %36 = vector.load %arg4[%c8, %c0_33, %c0_34] : memref<9x16x64xf32, #tpu.memory_space<vmem>>, vector<1x16x64xf32>
    %37 = vector.shape_cast %36 : vector<1x16x64xf32> to vector<16x64xf32>
    %cst_35 = arith.constant dense<0.000000e+00> : vector<16x128xf32>
    %38 = tpu.matmul %37, %11, %cst_35 {dimension_numbers = #tpu.dot_dimension_numbers<[1], [0], [0], [1], [0, 0, 1, 1], [], []>} : vector<16x64xf32>, vector<64x128xf32>, vector<16x128xf32> -> vector<16x128xf32>
    %39 = tpu.concatenate %14, %17, %20, %23, %26, %29, %32, %35, %38 in 1 : vector<16x128xf32>, vector<16x128xf32>, vector<16x128xf32>, vector<16x128xf32>, vector<16x128xf32>, vector<16x128xf32>, vector<16x128xf32>, vector<16x128xf32>, vector<16x128xf32> -> vector<16x1152xf32>
    %c0_36 = arith.constant 0 : index
    %c0_37 = arith.constant 0 : index
    %40 = vector.load %arg5[%c0_36, %c0_37] : memref<1152x128xf32, #tpu.memory_space<vmem>>, vector<1152x128xf32>
    %cst_38 = arith.constant dense<0.000000e+00> : vector<16x128xf32>
    %41 = tpu.matmul %39, %40, %cst_38 {dimension_numbers = #tpu.dot_dimension_numbers<[1], [0], [0], [1], [0, 0, 1, 1], [], []>} : vector<16x1152xf32>, vector<1152x128xf32>, vector<16x128xf32> -> vector<16x128xf32>
    %c0_39 = arith.constant 0 : index
    %c0_40 = arith.constant 0 : index
    %42 = vector.load %arg6[%c0_39, %c0_40] : memref<1x128xf32, #tpu.memory_space<vmem>>, vector<1x128xf32>
    %43 = vector.broadcast %42 : vector<1x128xf32> to vector<16x128xf32>
    %44 = arith.addf %41, %43 : vector<16x128xf32>
    %cst_41 = arith.constant 0.000000e+00 : f32
    %45 = vector.broadcast %cst_41 : f32 to vector<16x128xf32>
    %46 = arith.cmpf oge, %44, %45 : vector<16x128xf32>
    %cst_42 = arith.constant 0.00999999977 : f32
    %47 = vector.broadcast %cst_42 : f32 to vector<16x128xf32>
    %48 = arith.mulf %47, %44 : vector<16x128xf32>
    %49 = arith.select %46, %44, %48 : vector<16x128xi1>, vector<16x128xf32>
    %c0_43 = arith.constant 0 : index
    %c0_44 = arith.constant 0 : index
    %c0_45 = arith.constant 0 : index
    %50 = vector.load %arg7[%c0_43, %c0_44, %c0_45] : memref<9x4x16xf32, #tpu.memory_space<vmem>>, vector<1x4x16xf32>
    %51 = vector.shape_cast %50 : vector<1x4x16xf32> to vector<4x16xf32>
    %cst_46 = arith.constant dense<0.000000e+00> : vector<4x128xf32>
    %52 = tpu.matmul %51, %49, %cst_46 {dimension_numbers = #tpu.dot_dimension_numbers<[1], [0], [0], [1], [0, 0, 1, 1], [], []>} : vector<4x16xf32>, vector<16x128xf32>, vector<4x128xf32> -> vector<4x128xf32>
    %c1_47 = arith.constant 1 : index
    %c0_48 = arith.constant 0 : index
    %c0_49 = arith.constant 0 : index
    %53 = vector.load %arg7[%c1_47, %c0_48, %c0_49] : memref<9x4x16xf32, #tpu.memory_space<vmem>>, vector<1x4x16xf32>
    %54 = vector.shape_cast %53 : vector<1x4x16xf32> to vector<4x16xf32>
    %cst_50 = arith.constant dense<0.000000e+00> : vector<4x128xf32>
    %55 = tpu.matmul %54, %49, %cst_50 {dimension_numbers = #tpu.dot_dimension_numbers<[1], [0], [0], [1], [0, 0, 1, 1], [], []>} : vector<4x16xf32>, vector<16x128xf32>, vector<4x128xf32> -> vector<4x128xf32>
    %c2_51 = arith.constant 2 : index
    %c0_52 = arith.constant 0 : index
    %c0_53 = arith.constant 0 : index
    %56 = vector.load %arg7[%c2_51, %c0_52, %c0_53] : memref<9x4x16xf32, #tpu.memory_space<vmem>>, vector<1x4x16xf32>
    %57 = vector.shape_cast %56 : vector<1x4x16xf32> to vector<4x16xf32>
    %cst_54 = arith.constant dense<0.000000e+00> : vector<4x128xf32>
    %58 = tpu.matmul %57, %49, %cst_54 {dimension_numbers = #tpu.dot_dimension_numbers<[1], [0], [0], [1], [0, 0, 1, 1], [], []>} : vector<4x16xf32>, vector<16x128xf32>, vector<4x128xf32> -> vector<4x128xf32>
    %c3_55 = arith.constant 3 : index
    %c0_56 = arith.constant 0 : index
    %c0_57 = arith.constant 0 : index
    %59 = vector.load %arg7[%c3_55, %c0_56, %c0_57] : memref<9x4x16xf32, #tpu.memory_space<vmem>>, vector<1x4x16xf32>
    %60 = vector.shape_cast %59 : vector<1x4x16xf32> to vector<4x16xf32>
    %cst_58 = arith.constant dense<0.000000e+00> : vector<4x128xf32>
    %61 = tpu.matmul %60, %49, %cst_58 {dimension_numbers = #tpu.dot_dimension_numbers<[1], [0], [0], [1], [0, 0, 1, 1], [], []>} : vector<4x16xf32>, vector<16x128xf32>, vector<4x128xf32> -> vector<4x128xf32>
    %c4_59 = arith.constant 4 : index
    %c0_60 = arith.constant 0 : index
    %c0_61 = arith.constant 0 : index
    %62 = vector.load %arg7[%c4_59, %c0_60, %c0_61] : memref<9x4x16xf32, #tpu.memory_space<vmem>>, vector<1x4x16xf32>
    %63 = vector.shape_cast %62 : vector<1x4x16xf32> to vector<4x16xf32>
    %cst_62 = arith.constant dense<0.000000e+00> : vector<4x128xf32>
    %64 = tpu.matmul %63, %49, %cst_62 {dimension_numbers = #tpu.dot_dimension_numbers<[1], [0], [0], [1], [0, 0, 1, 1], [], []>} : vector<4x16xf32>, vector<16x128xf32>, vector<4x128xf32> -> vector<4x128xf32>
    %c5_63 = arith.constant 5 : index
    %c0_64 = arith.constant 0 : index
    %c0_65 = arith.constant 0 : index
    %65 = vector.load %arg7[%c5_63, %c0_64, %c0_65] : memref<9x4x16xf32, #tpu.memory_space<vmem>>, vector<1x4x16xf32>
    %66 = vector.shape_cast %65 : vector<1x4x16xf32> to vector<4x16xf32>
    %cst_66 = arith.constant dense<0.000000e+00> : vector<4x128xf32>
    %67 = tpu.matmul %66, %49, %cst_66 {dimension_numbers = #tpu.dot_dimension_numbers<[1], [0], [0], [1], [0, 0, 1, 1], [], []>} : vector<4x16xf32>, vector<16x128xf32>, vector<4x128xf32> -> vector<4x128xf32>
    %c6_67 = arith.constant 6 : index
    %c0_68 = arith.constant 0 : index
    %c0_69 = arith.constant 0 : index
    %68 = vector.load %arg7[%c6_67, %c0_68, %c0_69] : memref<9x4x16xf32, #tpu.memory_space<vmem>>, vector<1x4x16xf32>
    %69 = vector.shape_cast %68 : vector<1x4x16xf32> to vector<4x16xf32>
    %cst_70 = arith.constant dense<0.000000e+00> : vector<4x128xf32>
    %70 = tpu.matmul %69, %49, %cst_70 {dimension_numbers = #tpu.dot_dimension_numbers<[1], [0], [0], [1], [0, 0, 1, 1], [], []>} : vector<4x16xf32>, vector<16x128xf32>, vector<4x128xf32> -> vector<4x128xf32>
    %c7_71 = arith.constant 7 : index
    %c0_72 = arith.constant 0 : index
    %c0_73 = arith.constant 0 : index
    %71 = vector.load %arg7[%c7_71, %c0_72, %c0_73] : memref<9x4x16xf32, #tpu.memory_space<vmem>>, vector<1x4x16xf32>
    %72 = vector.shape_cast %71 : vector<1x4x16xf32> to vector<4x16xf32>
    %cst_74 = arith.constant dense<0.000000e+00> : vector<4x128xf32>
    %73 = tpu.matmul %72, %49, %cst_74 {dimension_numbers = #tpu.dot_dimension_numbers<[1], [0], [0], [1], [0, 0, 1, 1], [], []>} : vector<4x16xf32>, vector<16x128xf32>, vector<4x128xf32> -> vector<4x128xf32>
    %c8_75 = arith.constant 8 : index
    %c0_76 = arith.constant 0 : index
    %c0_77 = arith.constant 0 : index
    %74 = vector.load %arg7[%c8_75, %c0_76, %c0_77] : memref<9x4x16xf32, #tpu.memory_space<vmem>>, vector<1x4x16xf32>
    %75 = vector.shape_cast %74 : vector<1x4x16xf32> to vector<4x16xf32>
    %cst_78 = arith.constant dense<0.000000e+00> : vector<4x128xf32>
    %76 = tpu.matmul %75, %49, %cst_78 {dimension_numbers = #tpu.dot_dimension_numbers<[1], [0], [0], [1], [0, 0, 1, 1], [], []>} : vector<4x16xf32>, vector<16x128xf32>, vector<4x128xf32> -> vector<4x128xf32>
    %77 = tpu.concatenate %52, %55, %58, %61, %64, %67, %70, %73, %76 in 1 : vector<4x128xf32>, vector<4x128xf32>, vector<4x128xf32>, vector<4x128xf32>, vector<4x128xf32>, vector<4x128xf32>, vector<4x128xf32>, vector<4x128xf32>, vector<4x128xf32> -> vector<4x1152xf32>
    %c0_79 = arith.constant 0 : index
    %c0_80 = arith.constant 0 : index
    %78 = vector.load %arg8[%c0_79, %c0_80] : memref<1152x128xf32, #tpu.memory_space<vmem>>, vector<1152x128xf32>
    %cst_81 = arith.constant dense<0.000000e+00> : vector<4x128xf32>
    %79 = tpu.matmul %77, %78, %cst_81 {dimension_numbers = #tpu.dot_dimension_numbers<[1], [0], [0], [1], [0, 0, 1, 1], [], []>} : vector<4x1152xf32>, vector<1152x128xf32>, vector<4x128xf32> -> vector<4x128xf32>
    %c0_82 = arith.constant 0 : index
    %c0_83 = arith.constant 0 : index
    %80 = vector.load %arg9[%c0_82, %c0_83] : memref<1x128xf32, #tpu.memory_space<vmem>>, vector<1x128xf32>
    %81 = vector.broadcast %80 : vector<1x128xf32> to vector<4x128xf32>
    %82 = arith.addf %79, %81 : vector<4x128xf32>
    %cst_84 = arith.constant 0.000000e+00 : f32
    %83 = vector.broadcast %cst_84 : f32 to vector<4x128xf32>
    %84 = arith.cmpf oge, %82, %83 : vector<4x128xf32>
    %cst_85 = arith.constant 0.00999999977 : f32
    %85 = vector.broadcast %cst_85 : f32 to vector<4x128xf32>
    %86 = arith.mulf %85, %82 : vector<4x128xf32>
    %87 = arith.select %84, %82, %86 : vector<4x128xi1>, vector<4x128xf32>
    %cst_86 = arith.constant 0.000000e+00 : f32
    %88 = vector.broadcast %cst_86 : f32 to vector<1x128xf32>
    %cst_87 = arith.constant 0.000000e+00 : f32
    %89 = vector.broadcast %cst_87 : f32 to vector<1x128xf32>
    %cst_88 = arith.constant 0.000000e+00 : f32
    %90 = vector.broadcast %cst_88 : f32 to vector<1x128xf32>
    %cst_89 = arith.constant 0.000000e+00 : f32
    %91 = vector.broadcast %cst_89 : f32 to vector<1x128xf32>
    %c4_90 = arith.constant 4 : index
    %c0_91 = arith.constant 0 : index
    %c0_92 = arith.constant 0 : index
    %92 = vector.load %arg10[%c4_90, %c0_91, %c0_92] : memref<9x1x4xf32, #tpu.memory_space<vmem>>, vector<1x1x4xf32>
    %93 = vector.shape_cast %92 : vector<1x1x4xf32> to vector<1x4xf32>
    %cst_93 = arith.constant dense<0.000000e+00> : vector<1x128xf32>
    %94 = tpu.matmul %93, %87, %cst_93 {dimension_numbers = #tpu.dot_dimension_numbers<[1], [0], [0], [1], [0, 0, 1, 1], [], []>} : vector<1x4xf32>, vector<4x128xf32>, vector<1x128xf32> -> vector<1x128xf32>
    %c5_94 = arith.constant 5 : index
    %c0_95 = arith.constant 0 : index
    %c0_96 = arith.constant 0 : index
    %95 = vector.load %arg10[%c5_94, %c0_95, %c0_96] : memref<9x1x4xf32, #tpu.memory_space<vmem>>, vector<1x1x4xf32>
    %96 = vector.shape_cast %95 : vector<1x1x4xf32> to vector<1x4xf32>
    %cst_97 = arith.constant dense<0.000000e+00> : vector<1x128xf32>
    %97 = tpu.matmul %96, %87, %cst_97 {dimension_numbers = #tpu.dot_dimension_numbers<[1], [0], [0], [1], [0, 0, 1, 1], [], []>} : vector<1x4xf32>, vector<4x128xf32>, vector<1x128xf32> -> vector<1x128xf32>
    %cst_98 = arith.constant 0.000000e+00 : f32
    %98 = vector.broadcast %cst_98 : f32 to vector<1x128xf32>
    %c7_99 = arith.constant 7 : index
    %c0_100 = arith.constant 0 : index
    %c0_101 = arith.constant 0 : index
    %99 = vector.load %arg10[%c7_99, %c0_100, %c0_101] : memref<9x1x4xf32, #tpu.memory_space<vmem>>, vector<1x1x4xf32>
    %100 = vector.shape_cast %99 : vector<1x1x4xf32> to vector<1x4xf32>
    %cst_102 = arith.constant dense<0.000000e+00> : vector<1x128xf32>
    %101 = tpu.matmul %100, %87, %cst_102 {dimension_numbers = #tpu.dot_dimension_numbers<[1], [0], [0], [1], [0, 0, 1, 1], [], []>} : vector<1x4xf32>, vector<4x128xf32>, vector<1x128xf32> -> vector<1x128xf32>
    %c8_103 = arith.constant 8 : index
    %c0_104 = arith.constant 0 : index
    %c0_105 = arith.constant 0 : index
    %102 = vector.load %arg10[%c8_103, %c0_104, %c0_105] : memref<9x1x4xf32, #tpu.memory_space<vmem>>, vector<1x1x4xf32>
    %103 = vector.shape_cast %102 : vector<1x1x4xf32> to vector<1x4xf32>
    %cst_106 = arith.constant dense<0.000000e+00> : vector<1x128xf32>
    %104 = tpu.matmul %103, %87, %cst_106 {dimension_numbers = #tpu.dot_dimension_numbers<[1], [0], [0], [1], [0, 0, 1, 1], [], []>} : vector<1x4xf32>, vector<4x128xf32>, vector<1x128xf32> -> vector<1x128xf32>
    %105 = tpu.concatenate %88, %89, %90, %91, %94, %97, %98, %101, %104 in 1 : vector<1x128xf32>, vector<1x128xf32>, vector<1x128xf32>, vector<1x128xf32>, vector<1x128xf32>, vector<1x128xf32>, vector<1x128xf32>, vector<1x128xf32>, vector<1x128xf32> -> vector<1x1152xf32>
    %c0_107 = arith.constant 0 : index
    %c0_108 = arith.constant 0 : index
    %106 = vector.load %arg11[%c0_107, %c0_108] : memref<1152x128xf32, #tpu.memory_space<vmem>>, vector<1152x128xf32>
    %cst_109 = arith.constant dense<0.000000e+00> : vector<1x128xf32>
    %107 = tpu.matmul %105, %106, %cst_109 {dimension_numbers = #tpu.dot_dimension_numbers<[1], [0], [0], [1], [0, 0, 1, 1], [], []>} : vector<1x1152xf32>, vector<1152x128xf32>, vector<1x128xf32> -> vector<1x128xf32>
    %c0_110 = arith.constant 0 : index
    %c0_111 = arith.constant 0 : index
    %108 = vector.load %arg12[%c0_110, %c0_111] : memref<1x128xf32, #tpu.memory_space<vmem>>, vector<1x128xf32>
    %109 = arith.addf %107, %108 : vector<1x128xf32>
    %cst_112 = arith.constant 0.000000e+00 : f32
    %110 = vector.broadcast %cst_112 : f32 to vector<1x128xf32>
    %111 = arith.cmpf oge, %109, %110 : vector<1x128xf32>
    %cst_113 = arith.constant 0.00999999977 : f32
    %112 = vector.broadcast %cst_113 : f32 to vector<1x128xf32>
    %113 = arith.mulf %112, %109 : vector<1x128xf32>
    %114 = arith.select %111, %109, %113 : vector<1x128xi1>, vector<1x128xf32>
    %c0_114 = arith.constant 0 : index
    %c0_115 = arith.constant 0 : index
    %115 = vector.load %arg13[%c0_114, %c0_115] : memref<128x128xf32, #tpu.memory_space<vmem>>, vector<128x128xf32>
    %cst_116 = arith.constant dense<0.000000e+00> : vector<1x128xf32>
    %116 = tpu.matmul %114, %115, %cst_116 {dimension_numbers = #tpu.dot_dimension_numbers<[1], [0], [0], [1], [0, 0, 1, 1], [], []>} : vector<1x128xf32>, vector<128x128xf32>, vector<1x128xf32> -> vector<1x128xf32>
    %c0_117 = arith.constant 0 : index
    %c0_118 = arith.constant 0 : index
    %117 = vector.load %arg14[%c0_117, %c0_118] : memref<1x128xf32, #tpu.memory_space<vmem>>, vector<1x128xf32>
    %118 = arith.addf %116, %117 : vector<1x128xf32>
    %c0_119 = arith.constant 0 : index
    %c0_120 = arith.constant 0 : index
    %c0_121 = arith.constant 0 : index
    %119 = vector.load %arg15[%c0_119, %c0_120, %c0_121] : memref<1x1x128xf32, #tpu.memory_space<vmem>>, vector<1x1x128xf32>
    %120 = vector.shape_cast %119 : vector<1x1x128xf32> to vector<1x128xf32>
    %121 = vector.shape_cast %118 : vector<1x128xf32> to vector<1x1x128xf32>
    tpu.vector_store %arg15[%c0_119, %c0_120, %c0_121], %121 {strides = array<i32>} : memref<1x1x128xf32, #tpu.memory_space<vmem>>, vector<1x1x128xf32>,
    return
  }
  func.func @transform_0(%arg0: i32) -> (i32, i32, i32) {
    %c0_i32 = arith.constant 0 : i32
    %c0_i32_0 = arith.constant 0 : i32
    %c0_i32_1 = arith.constant 0 : i32
    return %arg0, %c0_i32, %c0_i32_0 : i32, i32, i32
  }
  func.func @transform_1(%arg0: i32) -> (i32, i32) {
    %c0_i32 = arith.constant 0 : i32
    %c0_i32_0 = arith.constant 0 : i32
    %c0_i32_1 = arith.constant 0 : i32
    return %c0_i32, %c0_i32_0 : i32, i32
  }
  func.func @transform_2(%arg0: i32) -> (i32, i32) {
    %c0_i32 = arith.constant 0 : i32
    %c0_i32_0 = arith.constant 0 : i32
    %c0_i32_1 = arith.constant 0 : i32
    return %c0_i32, %c0_i32_0 : i32, i32
  }
  func.func @transform_3(%arg0: i32) -> (i32, i32, i32) {
    %c0_i32 = arith.constant 0 : i32
    %c0_i32_0 = arith.constant 0 : i32
    %c0_i32_1 = arith.constant 0 : i32
    %c0_i32_2 = arith.constant 0 : i32
    return %c0_i32, %c0_i32_0, %c0_i32_1 : i32, i32, i32
  }
  func.func @transform_4(%arg0: i32) -> (i32, i32) {
    %c0_i32 = arith.constant 0 : i32
    %c0_i32_0 = arith.constant 0 : i32
    %c0_i32_1 = arith.constant 0 : i32
    return %c0_i32, %c0_i32_0 : i32, i32
  }
  func.func @transform_5(%arg0: i32) -> (i32, i32) {
    %c0_i32 = arith.constant 0 : i32
    %c0_i32_0 = arith.constant 0 : i32
    %c0_i32_1 = arith.constant 0 : i32
    return %c0_i32, %c0_i32_0 : i32, i32
  }
  func.func @transform_6(%arg0: i32) -> (i32, i32, i32) {
    %c0_i32 = arith.constant 0 : i32
    %c0_i32_0 = arith.constant 0 : i32
    %c0_i32_1 = arith.constant 0 : i32
    %c0_i32_2 = arith.constant 0 : i32
    return %c0_i32, %c0_i32_0, %c0_i32_1 : i32, i32, i32
  }
  func.func @transform_7(%arg0: i32) -> (i32, i32) {
    %c0_i32 = arith.constant 0 : i32
    %c0_i32_0 = arith.constant 0 : i32
    %c0_i32_1 = arith.constant 0 : i32
    return %c0_i32, %c0_i32_0 : i32, i32
  }
  func.func @transform_8(%arg0: i32) -> (i32, i32) {
    %c0_i32 = arith.constant 0 : i32
    %c0_i32_0 = arith.constant 0 : i32
    %c0_i32_1 = arith.constant 0 : i32
    return %c0_i32, %c0_i32_0 : i32, i32
  }
  func.func @transform_9(%arg0: i32) -> (i32, i32, i32) {
    %c0_i32 = arith.constant 0 : i32
    %c0_i32_0 = arith.constant 0 : i32
    %c0_i32_1 = arith.constant 0 : i32
    %c0_i32_2 = arith.constant 0 : i32
    return %c0_i32, %c0_i32_0, %c0_i32_1 : i32, i32, i32
  }
  func.func @transform_10(%arg0: i32) -> (i32, i32) {
    %c0_i32 = arith.constant 0 : i32
    %c0_i32_0 = arith.constant 0 : i32
    %c0_i32_1 = arith.constant 0 : i32
    return %c0_i32, %c0_i32_0 : i32, i32
  }
  func.func @transform_11(%arg0: i32) -> (i32, i32) {
    %c0_i32 = arith.constant 0 : i32
    %c0_i32_0 = arith.constant 0 : i32
    %c0_i32_1 = arith.constant 0 : i32
    return %c0_i32, %c0_i32_0 : i32, i32
  }
  func.func @transform_12(%arg0: i32) -> (i32, i32) {
    %c0_i32 = arith.constant 0 : i32
    %c0_i32_0 = arith.constant 0 : i32
    %c0_i32_1 = arith.constant 0 : i32
    return %c0_i32, %c0_i32_0 : i32, i32
  }
  func.func @transform_13(%arg0: i32) -> (i32, i32) {
    %c0_i32 = arith.constant 0 : i32
    %c0_i32_0 = arith.constant 0 : i32
    %c0_i32_1 = arith.constant 0 : i32
    return %c0_i32, %c0_i32_0 : i32, i32
  }
  func.func @transform_14(%arg0: i32) -> (i32, i32, i32) {
    %c0_i32 = arith.constant 0 : i32
    %c0_i32_0 = arith.constant 0 : i32
    %c0_i32_1 = arith.constant 0 : i32
    return %arg0, %c0_i32, %c0_i32_0 : i32, i32, i32
  }
}

</mosaic_0001>

<llo_original>
// kernel: gradual_style_block_pallas.1
$region0: #{gradual_style_block_pallas.1}
  #allocation0 [shape = 'u32[]', space=smem, size = 0x4, offset = 0x4, fixed_abs, tag = 'smem constant byte address 0x4 - core index']
  #allocation1 [shape = 'u32[72,128]{1,0:T(1,128)}', space=vmem, size = 0x9000, scoped, tag = 'internal scratch']
  %s0 = inlined_call_operand.vmem [shape: f32[2,64,128], index: 0, kind: input, shape index: {}]
  %s1 = inlined_call_operand.vmem [shape: f32[128,128], index: 1, kind: input, shape index: {}]
  %s2 = inlined_call_operand.vmem [shape: f32[1,128], index: 2, kind: input, shape index: {}]
  %s3 = inlined_call_operand.vmem [shape: f32[9,16,64], index: 3, kind: input, shape index: {}]
  %s4 = inlined_call_operand.vmem [shape: f32[1152,128], index: 4, kind: input, shape index: {}]
  %s5 = inlined_call_operand.vmem [shape: f32[1,128], index: 5, kind: input, shape index: {}]
  %s6 = inlined_call_operand.vmem [shape: f32[9,4,16], index: 6, kind: input, shape index: {}]
  %s7 = inlined_call_operand.vmem [shape: f32[1152,128], index: 7, kind: input, shape index: {}]
  %s8 = inlined_call_operand.vmem [shape: f32[1,128], index: 8, kind: input, shape index: {}]
  %s9 = inlined_call_operand.vmem [shape: f32[9,1,4], index: 9, kind: input, shape index: {}]
  %s10 = inlined_call_operand.vmem [shape: f32[1152,128], index: 10, kind: input, shape index: {}]
  %s11 = inlined_call_operand.vmem [shape: f32[1,128], index: 11, kind: input, shape index: {}]
  %s12 = inlined_call_operand.vmem [shape: f32[128,128], index: 12, kind: input, shape index: {}]
  %s13 = inlined_call_operand.vmem [shape: f32[1,128], index: 13, kind: input, shape index: {}]
  %s14 = inlined_call_operand.hbm [shape: f32[2,1,128], index: 14, kind: output, shape index: {}]
  %s15 = sld [smem:[#allocation0]]
  $region89: #{gradual_style_block_pallas.1} parent=0
    _
  %s17 = ssub.s32 1, %s15
  %s18 = scalar_select 0, %s17, %s15
  $region1: #{gradual_style_block_pallas.1} parent=0
    #allocation2 [shape = 'u8[1024]{0}', space=vmem, size = 0x400, scoped, tag = 'output window, operand 0']
    #allocation3 [shape = 's32[2]{0}', space=sflag, size = 0x8, scoped, tag = 'scoped memory for gradual_style_block_pallas.1']
    %19 = vsyncpa [#allocation3], 0
    %s20 = scalar_lea.sflag [#allocation3], 1
    %21 = vsyncpa %s20, 0
    loop: start=0, step=1, limit=4
    $region2: #{gradual_style_block_pallas.1} parent=1 // loop_pre_header
      _
    $region3: #{gradual_style_block_pallas.1} parent=1 // loop_header
      %s23 = sphi 0, %s27
      %p24 = scmp.ge.s32.totalorder %s23, 4
      %s33 = sphi 0, %s35
      %s36 = sphi 0, %s33
      %s37 = sphi 0, %s36
      %s53 = sphi 0, %s37
      %s57 = sphi 0, %s57
      %s59 = sphi 0, %s57
      %s60 = sphi 0, %s59
      %s74 = sphi 0, %s60
      %s78 = sphi 0, %s78
      %s80 = sphi 0, %s78
      %s81 = sphi 0, %s80
      %s95 = sphi 0, %s81
      %s99 = sphi 0, %s99
      %s101 = sphi 0, %s99
      %s102 = sphi 0, %s101
      %s116 = sphi 0, %s102
      %s120 = sphi 0, %s120
      %s122 = sphi 0, %s120
      %s123 = sphi 0, %s122
      %s137 = sphi 0, %s123
      %s141 = sphi 0, %s141
      %s143 = sphi 0, %s141
      %s144 = sphi 0, %s143
      %s158 = sphi 0, %s144
      %s162 = sphi 0, %s162
      %s164 = sphi 0, %s162
      %s165 = sphi 0, %s164
      %s179 = sphi 0, %s165
      %s183 = sphi 0, %s183
      %s185 = sphi 0, %s183
      %s186 = sphi 0, %s185
      %s200 = sphi 0, %s186
      %s204 = sphi 0, %s204
      %s206 = sphi 0, %s204
      %s207 = sphi 0, %s206
      %s221 = sphi 0, %s207
      %s225 = sphi 0, %s225
      %s227 = sphi 0, %s225
      %s228 = sphi 0, %s227
      %s242 = sphi 0, %s228
      %s246 = sphi 0, %s246
      %s248 = sphi 0, %s246
      %s249 = sphi 0, %s248
      %s263 = sphi 0, %s249
      %s267 = sphi 0, %s267
      %s269 = sphi 0, %s267
      %s270 = sphi 0, %s269
      %s284 = sphi 0, %s270
      %s288 = sphi 0, %s288
      %s290 = sphi 0, %s288
      %s291 = sphi 0, %s290
      %s305 = sphi 0, %s291
      %s309 = sphi 0, %s309
      %s311 = sphi 0, %s309
      %s312 = sphi 0, %s311
      %s326 = sphi 0, %s312
      %s332 = sphi 0, %s334
      %s335 = sphi 0, %s332
      %s336 = sphi 0, %s335
      %s352 = sphi 0, %s336
    $region4: #{gradual_style_block_pallas.1} parent=1 // loop_header_branch
      %26 = sbr.rel (%p24) target = $region8
    $region5: #{gradual_style_block_pallas.1} parent=1 // loop_body
      %s28 = ssub.s32 %s23, 1
      %s29 = ssub.s32 %s23, 2
      %s30 = sadd.s32 %s23, 1
      %s31 = ssub.s32 %s23, %s30
      %p32 = scmp.eq.s32.totalorder %s31, 0
      %s34 = sadd.s32 %s33, 1
      %s35 = scalar_select %p32, %s33, %s34
      %p38 = pneg %p32
      %p39 = scmp.eq.s32.totalorder %s23, 1
      %p40 = por %p38, %p39
      %p41 = scmp.ne.s32.totalorder %s33, %s36
      %p42 = scmp.eq.s32.totalorder %s23, 0
      %p43 = por %p41, %p42
      %p44 = scmp.ne.s32.totalorder %s33, %s36
      %p45 = scmp.eq.s32.totalorder %s28, 1
      %p46 = por %p44, %p45
      %p47 = scmp.ne.s32.totalorder %s36, %s37
      %p48 = scmp.eq.s32.totalorder %s28, 0
      %p49 = por %p47, %p48
      %p50 = scmp.ne.s32.totalorder %s36, %s37
      %p51 = scmp.eq.s32.totalorder %s29, 1
      %p52 = por %p50, %p51
      %p54 = scmp.ne.s32.totalorder %s37, %s53
      %p55 = scmp.eq.s32.totalorder %s29, 0
      %p56 = por %p54, %p55
      %s58 = sadd.s32 %s57, 1
      %p61 = scmp.eq.s32.totalorder %s23, 1
      %p62 = scmp.ne.s32.totalorder %s57, %s59
      %p63 = scmp.eq.s32.totalorder %s23, 0
      %p64 = por %p62, %p63
      %p65 = scmp.ne.s32.totalorder %s57, %s59
      %p66 = scmp.eq.s32.totalorder %s28, 1
      %p67 = por %p65, %p66
      %p68 = scmp.ne.s32.totalorder %s59, %s60
      %p69 = scmp.eq.s32.totalorder %s28, 0
      %p70 = por %p68, %p69
      %p71 = scmp.ne.s32.totalorder %s59, %s60
      %p72 = scmp.eq.s32.totalorder %s29, 1
      %p73 = por %p71, %p72
      %p75 = scmp.ne.s32.totalorder %s60, %s74
      %p76 = scmp.eq.s32.totalorder %s29, 0
      %p77 = por %p75, %p76
      %s79 = sadd.s32 %s78, 1
      %p82 = scmp.eq.s32.totalorder %s23, 1
      %p83 = scmp.ne.s32.totalorder %s78, %s80
      %p84 = scmp.eq.s32.totalorder %s23, 0
      %p85 = por %p83, %p84
      %p86 = scmp.ne.s32.totalorder %s78, %s80
      %p87 = scmp.eq.s32.totalorder %s28, 1
      %p88 = por %p86, %p87
      %p89 = scmp.ne.s32.totalorder %s80, %s81
      %p90 = scmp.eq.s32.totalorder %s28, 0
      %p91 = por %p89, %p90
      %p92 = scmp.ne.s32.totalorder %s80, %s81
      %p93 = scmp.eq.s32.totalorder %s29, 1
      %p94 = por %p92, %p93
      %p96 = scmp.ne.s32.totalorder %s81, %s95
      %p97 = scmp.eq.s32.totalorder %s29, 0
      %p98 = por %p96, %p97
      %s100 = sadd.s32 %s99, 1
      %p103 = scmp.eq.s32.totalorder %s23, 1
      %p104 = scmp.ne.s32.totalorder %s99, %s101
      %p105 = scmp.eq.s32.totalorder %s23, 0
      %p106 = por %p104, %p105
      %p107 = scmp.ne.s32.totalorder %s99, %s101
      %p108 = scmp.eq.s32.totalorder %s28, 1
      %p109 = por %p107, %p108
      %p110 = scmp.ne.s32.totalorder %s101, %s102
      %p111 = scmp.eq.s32.totalorder %s28, 0
      %p112 = por %p110, %p111
      %p113 = scmp.ne.s32.totalorder %s101, %s102
      %p114 = scmp.eq.s32.totalorder %s29, 1
      %p115 = por %p113, %p114
      %p117 = scmp.ne.s32.totalorder %s102, %s116
      %p118 = scmp.eq.s32.totalorder %s29, 0
      %p119 = por %p117, %p118
      %s121 = sadd.s32 %s120, 1
      %p124 = scmp.eq.s32.totalorder %s23, 1
      %p125 = scmp.ne.s32.totalorder %s120, %s122
      %p126 = scmp.eq.s32.totalorder %s23, 0
      %p127 = por %p125, %p126
      %p128 = scmp.ne.s32.totalorder %s120, %s122
      %p129 = scmp.eq.s32.totalorder %s28, 1
      %p130 = por %p128, %p129
      %p131 = scmp.ne.s32.totalorder %s122, %s123
      %p132 = scmp.eq.s32.totalorder %s28, 0
      %p133 = por %p131, %p132
      %p134 = scmp.ne.s32.totalorder %s122, %s123
      %p135 = scmp.eq.s32.totalorder %s29, 1
      %p136 = por %p134, %p135
      %p138 = scmp.ne.s32.totalorder %s123, %s137
      %p139 = scmp.eq.s32.totalorder %s29, 0
      %p140 = por %p138, %p139
      %s142 = sadd.s32 %s141, 1
      %p145 = scmp.eq.s32.totalorder %s23, 1
      %p146 = scmp.ne.s32.totalorder %s141, %s143
      %p147 = scmp.eq.s32.totalorder %s23, 0
      %p148 = por %p146, %p147
      %p149 = scmp.ne.s32.totalorder %s141, %s143
      %p150 = scmp.eq.s32.totalorder %s28, 1
      %p151 = por %p149, %p150
      %p152 = scmp.ne.s32.totalorder %s143, %s144
      %p153 = scmp.eq.s32.totalorder %s28, 0
      %p154 = por %p152, %p153
      %p155 = scmp.ne.s32.totalorder %s143, %s144
      %p156 = scmp.eq.s32.totalorder %s29, 1
      %p157 = por %p155, %p156
      %p159 = scmp.ne.s32.totalorder %s144, %s158
      %p160 = scmp.eq.s32.totalorder %s29, 0
      %p161 = por %p159, %p160
      %s163 = sadd.s32 %s162, 1
      %p166 = scmp.eq.s32.totalorder %s23, 1
      %p167 = scmp.ne.s32.totalorder %s162, %s164
      %p168 = scmp.eq.s32.totalorder %s23, 0
      %p169 = por %p167, %p168
      %p170 = scmp.ne.s32.totalorder %s162, %s164
      %p171 = scmp.eq.s32.totalorder %s28, 1
      %p172 = por %p170, %p171
      %p173 = scmp.ne.s32.totalorder %s164, %s165
      %p174 = scmp.eq.s32.totalorder %s28, 0
      %p175 = por %p173, %p174
      %p176 = scmp.ne.s32.totalorder %s164, %s165
      %p177 = scmp.eq.s32.totalorder %s29, 1
      %p178 = por %p176, %p177
      %p180 = scmp.ne.s32.totalorder %s165, %s179
      %p181 = scmp.eq.s32.totalorder %s29, 0
      %p182 = por %p180, %p181
      %s184 = sadd.s32 %s183, 1
      %p187 = scmp.eq.s32.totalorder %s23, 1
      %p188 = scmp.ne.s32.totalorder %s183, %s185
      %p189 = scmp.eq.s32.totalorder %s23, 0
      %p190 = por %p188, %p189
      %p191 = scmp.ne.s32.totalorder %s183, %s185
      %p192 = scmp.eq.s32.totalorder %s28, 1
      %p193 = por %p191, %p192
      %p194 = scmp.ne.s32.totalorder %s185, %s186
      %p195 = scmp.eq.s32.totalorder %s28, 0
      %p196 = por %p194, %p195
      %p197 = scmp.ne.s32.totalorder %s185, %s186
      %p198 = scmp.eq.s32.totalorder %s29, 1
      %p199 = por %p197, %p198
      %p201 = scmp.ne.s32.totalorder %s186, %s200
      %p202 = scmp.eq.s32.totalorder %s29, 0
      %p203 = por %p201, %p202
      %s205 = sadd.s32 %s204, 1
      %p208 = scmp.eq.s32.totalorder %s23, 1
      %p209 = scmp.ne.s32.totalorder %s204, %s206
      %p210 = scmp.eq.s32.totalorder %s23, 0
      %p211 = por %p209, %p210
      %p212 = scmp.ne.s32.totalorder %s204, %s206
      %p213 = scmp.eq.s32.totalorder %s28, 1
      %p214 = por %p212, %p213
      %p215 = scmp.ne.s32.totalorder %s206, %s207
      %p216 = scmp.eq.s32.totalorder %s28, 0
      %p217 = por %p215, %p216
      %p218 = scmp.ne.s32.totalorder %s206, %s207
      %p219 = scmp.eq.s32.totalorder %s29, 1
      %p220 = por %p218, %p219
      %p222 = scmp.ne.s32.totalorder %s207, %s221
      %p223 = scmp.eq.s32.totalorder %s29, 0
      %p224 = por %p222, %p223
      %s226 = sadd.s32 %s225, 1
      %p229 = scmp.eq.s32.totalorder %s23, 1
      %p230 = scmp.ne.s32.totalorder %s225, %s227
      %p231 = scmp.eq.s32.totalorder %s23, 0
      %p232 = por %p230, %p231
      %p233 = scmp.ne.s32.totalorder %s225, %s227
      %p234 = scmp.eq.s32.totalorder %s28, 1
      %p235 = por %p233, %p234
      %p236 = scmp.ne.s32.totalorder %s227, %s228
      %p237 = scmp.eq.s32.totalorder %s28, 0
      %p238 = por %p236, %p237
      %p239 = scmp.ne.s32.totalorder %s227, %s228
      %p240 = scmp.eq.s32.totalorder %s29, 1
      %p241 = por %p239, %p240
      %p243 = scmp.ne.s32.totalorder %s228, %s242
      %p244 = scmp.eq.s32.totalorder %s29, 0
      %p245 = por %p243, %p244
      %s247 = sadd.s32 %s246, 1
      %p250 = scmp.eq.s32.totalorder %s23, 1
      %p251 = scmp.ne.s32.totalorder %s246, %s248
      %p252 = scmp.eq.s32.totalorder %s23, 0
      %p253 = por %p251, %p252
      %p254 = scmp.ne.s32.totalorder %s246, %s248
      %p255 = scmp.eq.s32.totalorder %s28, 1
      %p256 = por %p254, %p255
      %p257 = scmp.ne.s32.totalorder %s248, %s249
      %p258 = scmp.eq.s32.totalorder %s28, 0
      %p259 = por %p257, %p258
      %p260 = scmp.ne.s32.totalorder %s248, %s249
      %p261 = scmp.eq.s32.totalorder %s29, 1
      %p262 = por %p260, %p261
      %p264 = scmp.ne.s32.totalorder %s249, %s263
      %p265 = scmp.eq.s32.totalorder %s29, 0
      %p266 = por %p264, %p265
      %s268 = sadd.s32 %s267, 1
      %p271 = scmp.eq.s32.totalorder %s23, 1
      %p272 = scmp.ne.s32.totalorder %s267, %s269
      %p273 = scmp.eq.s32.totalorder %s23, 0
      %p274 = por %p272, %p273
      %p275 = scmp.ne.s32.totalorder %s267, %s269
      %p276 = scmp.eq.s32.totalorder %s28, 1
      %p277 = por %p275, %p276
      %p278 = scmp.ne.s32.totalorder %s269, %s270
      %p279 = scmp.eq.s32.totalorder %s28, 0
      %p280 = por %p278, %p279
      %p281 = scmp.ne.s32.totalorder %s269, %s270
      %p282 = scmp.eq.s32.totalorder %s29, 1
      %p283 = por %p281, %p282
      %p285 = scmp.ne.s32.totalorder %s270, %s284
      %p286 = scmp.eq.s32.totalorder %s29, 0
      %p287 = por %p285, %p286
      %s289 = sadd.s32 %s288, 1
      %p292 = scmp.eq.s32.totalorder %s23, 1
      %p293 = scmp.ne.s32.totalorder %s288, %s290
      %p294 = scmp.eq.s32.totalorder %s23, 0
      %p295 = por %p293, %p294
      %p296 = scmp.ne.s32.totalorder %s288, %s290
      %p297 = scmp.eq.s32.totalorder %s28, 1
      %p298 = por %p296, %p297
      %p299 = scmp.ne.s32.totalorder %s290, %s291
      %p300 = scmp.eq.s32.totalorder %s28, 0
      %p301 = por %p299, %p300
      %p302 = scmp.ne.s32.totalorder %s290, %s291
      %p303 = scmp.eq.s32.totalorder %s29, 1
      %p304 = por %p302, %p303
      %p306 = scmp.ne.s32.totalorder %s291, %s305
      %p307 = scmp.eq.s32.totalorder %s29, 0
      %p308 = por %p306, %p307
      %s310 = sadd.s32 %s309, 1
      %p313 = scmp.eq.s32.totalorder %s23, 1
      %p314 = scmp.ne.s32.totalorder %s309, %s311
      %p315 = scmp.eq.s32.totalorder %s23, 0
      %p316 = por %p314, %p315
      %p317 = scmp.ne.s32.totalorder %s309, %s311
      %p318 = scmp.eq.s32.totalorder %s28, 1
      %p319 = por %p317, %p318
      %p320 = scmp.ne.s32.totalorder %s311, %s312
      %p321 = scmp.eq.s32.totalorder %s28, 0
      %p322 = por %p320, %p321
      %p323 = scmp.ne.s32.totalorder %s311, %s312
      %p324 = scmp.eq.s32.totalorder %s29, 1
      %p325 = por %p323, %p324
      %p327 = scmp.ne.s32.totalorder %s312, %s326
      %p328 = scmp.eq.s32.totalorder %s29, 0
      %p329 = por %p327, %p328
      %s330 = ssub.s32 %s23, %s30
      %p331 = scmp.eq.s32.totalorder %s330, 0
      %s333 = sadd.s32 %s332, 1
      %s334 = scalar_select %p331, %s332, %s333
      %p337 = pneg %p331
      %p338 = scmp.eq.s32.totalorder %s23, 1
      %p339 = por %p337, %p338
      %p340 = scmp.ne.s32.totalorder %s332, %s335
      %p341 = scmp.eq.s32.totalorder %s23, 0
      %p342 = por %p340, %p341
      %p343 = scmp.ne.s32.totalorder %s332, %s335
      %p344 = scmp.eq.s32.totalorder %s28, 1
      %p345 = por %p343, %p344
      %p346 = scmp.ne.s32.totalorder %s335, %s336
      %p347 = scmp.eq.s32.totalorder %s28, 0
      %p348 = por %p346, %p347
      %p349 = scmp.ne.s32.totalorder %s335, %s336
      %p350 = scmp.eq.s32.totalorder %s29, 1
      %p351 = por %p349, %p350
      %p353 = scmp.ne.s32.totalorder %s336, %s352
      %p354 = scmp.eq.s32.totalorder %s29, 0
      %p355 = por %p353, %p354
      %p356 = scmp.le.s32.totalorder 1, %s23
      %p357 = scmp.lt.s32.totalorder %s23, 3
      %p358 = pnand %p356, %p357
      %p359 = pneg %p358
      // Predicated region
      $region9: #{gradual_style_block_pallas.1} parent=5 // pred_check
        _
      $region10: #{gradual_style_block_pallas.1} parent=5 // pred_check_branch
        %361 = sbr.rel (%p358) target = $region12
      $region11: #{gradual_style_block_pallas.1} parent=5 // pred_region
        %s362 = ssub.s32 %s23, 1
        // Predicated region
        $region13: #{gradual_style_block_pallas.1} parent=11 // pred_check
          %p363 = pneg %p70
        $region14: #{gradual_style_block_pallas.1} parent=11 // pred_check_branch
          %365 = sbr.rel (%p363) target = $region16
        $region15: #{gradual_style_block_pallas.1} parent=11 // pred_region
          _
        $region16: #{gradual_style_block_pallas.1} parent=11 // pred_fallthru
          _
        // Predicated region
        $region17: #{gradual_style_block_pallas.1} parent=11 // pred_check
          %p366 = pneg %p91
        $region18: #{gradual_style_block_pallas.1} parent=11 // pred_check_branch
          %368 = sbr.rel (%p366) target = $region20
        $region19: #{gradual_style_block_pallas.1} parent=11 // pred_region
          _
        $region20: #{gradual_style_block_pallas.1} parent=11 // pred_fallthru
          _
        // Predicated region
        $region21: #{gradual_style_block_pallas.1} parent=11 // pred_check
          %p369 = pneg %p112
        $region22: #{gradual_style_block_pallas.1} parent=11 // pred_check_branch
          %371 = sbr.rel (%p369) target = $region24
        $region23: #{gradual_style_block_pallas.1} parent=11 // pred_region
          _
        $region24: #{gradual_style_block_pallas.1} parent=11 // pred_fallthru
          _
        // Predicated region
        $region25: #{gradual_style_block_pallas.1} parent=11 // pred_check
          %p372 = pneg %p133
        $region26: #{gradual_style_block_pallas.1} parent=11 // pred_check_branch
          %374 = sbr.rel (%p372) target = $region28
        $region27: #{gradual_style_block_pallas.1} parent=11 // pred_region
          _
        $region28: #{gradual_style_block_pallas.1} parent=11 // pred_fallthru
          _
        // Predicated region
        $region29: #{gradual_style_block_pallas.1} parent=11 // pred_check
          %p375 = pneg %p154
        $region30: #{gradual_style_block_pallas.1} parent=11 // pred_check_branch
          %377 = sbr.rel (%p375) target = $region32
        $region31: #{gradual_style_block_pallas.1} parent=11 // pred_region
          _
        $region32: #{gradual_style_block_pallas.1} parent=11 // pred_fallthru
          _
        // Predicated region
        $region33: #{gradual_style_block_pallas.1} parent=11 // pred_check
          %p378 = pneg %p175
        $region34: #{gradual_style_block_pallas.1} parent=11 // pred_check_branch
          %380 = sbr.rel (%p378) target = $region36
        $region35: #{gradual_style_block_pallas.1} parent=11 // pred_region
          _
        $region36: #{gradual_style_block_pallas.1} parent=11 // pred_fallthru
          _
        // Predicated region
        $region37: #{gradual_style_block_pallas.1} parent=11 // pred_check
          %p381 = pneg %p196
        $region38: #{gradual_style_block_pallas.1} parent=11 // pred_check_branch
          %383 = sbr.rel (%p381) target = $region40
        $region39: #{gradual_style_block_pallas.1} parent=11 // pred_region
          _
        $region40: #{gradual_style_block_pallas.1} parent=11 // pred_fallthru
          _
        // Predicated region
        $region41: #{gradual_style_block_pallas.1} parent=11 // pred_check
          %p384 = pneg %p217
        $region42: #{gradual_style_block_pallas.1} parent=11 // pred_check_branch
          %386 = sbr.rel (%p384) target = $region44
        $region43: #{gradual_style_block_pallas.1} parent=11 // pred_region
          _
        $region44: #{gradual_style_block_pallas.1} parent=11 // pred_fallthru
          _
        // Predicated region
        $region45: #{gradual_style_block_pallas.1} parent=11 // pred_check
          %p387 = pneg %p238
        $region46: #{gradual_style_block_pallas.1} parent=11 // pred_check_branch
          %389 = sbr.rel (%p387) target = $region48
        $region47: #{gradual_style_block_pallas.1} parent=11 // pred_region
          _
        $region48: #{gradual_style_block_pallas.1} parent=11 // pred_fallthru
          _
        // Predicated region
        $region49: #{gradual_style_block_pallas.1} parent=11 // pred_check
          %p390 = pneg %p259
        $region50: #{gradual_style_block_pallas.1} parent=11 // pred_check_branch
          %392 = sbr.rel (%p390) target = $region52
        $region51: #{gradual_style_block_pallas.1} parent=11 // pred_region
          _
        $region52: #{gradual_style_block_pallas.1} parent=11 // pred_fallthru
          _
        // Predicated region
        $region53: #{gradual_style_block_pallas.1} parent=11 // pred_check
          %p393 = pneg %p280
        $region54: #{gradual_style_block_pallas.1} parent=11 // pred_check_branch
          %395 = sbr.rel (%p393) target = $region56
        $region55: #{gradual_style_block_pallas.1} parent=11 // pred_region
          _
        $region56: #{gradual_style_block_pallas.1} parent=11 // pred_fallthru
          _
        // Predicated region
        $region57: #{gradual_style_block_pallas.1} parent=11 // pred_check
          %p396 = pneg %p301
        $region58: #{gradual_style_block_pallas.1} parent=11 // pred_check_branch
          %398 = sbr.rel (%p396) target = $region60
        $region59: #{gradual_style_block_pallas.1} parent=11 // pred_region
          _
        $region60: #{gradual_style_block_pallas.1} parent=11 // pred_fallthru
          _
        // Predicated region
        $region61: #{gradual_style_block_pallas.1} parent=11 // pred_check
          %p399 = pneg %p322
        $region62: #{gradual_style_block_pallas.1} parent=11 // pred_check_branch
          %401 = sbr.rel (%p399) target = $region64
        $region63: #{gradual_style_block_pallas.1} parent=11 // pred_region
          _
        $region64: #{gradual_style_block_pallas.1} parent=11 // pred_fallthru
          _
      $region12: #{gradual_style_block_pallas.1} parent=5 // pred_fallthru
        _
      %p402 = scmp.lt.s32.totalorder %s23, 2
      // Predicated region
      $region65: #{gradual_style_block_pallas.1} parent=5 // pred_check
        %p403 = pneg %p402
      $region66: #{gradual_style_block_pallas.1} parent=5 // pred_check_branch
        %405 = sbr.rel (%p403) target = $region68
      $region67: #{gradual_style_block_pallas.1} parent=5 // pred_region
        // Predicated region
        $region69: #{gradual_style_block_pallas.1} parent=67 // pred_check
          %p406 = pneg %p43
        $region70: #{gradual_style_block_pallas.1} parent=67 // pred_check_branch
          %408 = sbr.rel (%p406) target = $region72
        $region71: #{gradual_style_block_pallas.1} parent=67 // pred_region
          %p409 = scmp.lt.s32.totalorder %s23, 1
          %s410 = scalar_select %p409, %s23, 1
          %s411 = smul.addr %s410, 8
          %s412 = smul.addr %s411, 8
          %s413 = scalar_lea.vmem %s0, %s412
        $region72: #{gradual_style_block_pallas.1} parent=67 // pred_fallthru
          _
      $region68: #{gradual_style_block_pallas.1} parent=5 // pred_fallthru
        _
      %p414 = scmp.le.s32.totalorder 1, %s23
      %p415 = scmp.lt.s32.totalorder %s23, 3
      %p416 = pnand %p414, %p415
      %p417 = pneg %p416
      // Predicated region
      $region73: #{gradual_style_block_pallas.1} parent=5 // pred_check
        _
      $region74: #{gradual_style_block_pallas.1} parent=5 // pred_check_branch
        %419 = sbr.rel (%p416) target = $region76
      $region75: #{gradual_style_block_pallas.1} parent=5 // pred_region
        %s420 = ssub.s32 %s23, 1
        %p421 = scmp.lt.s32.totalorder %s28, 1
        %s422 = scalar_select %p421, %s28, 1
        %s423 = smul.addr %s422, 8
        %s424 = smul.addr %s423, 8
        %s425 = scalar_lea.vmem %s0, %s424
        %p426 = pneg %p49
        %p427 = pneg %p46
        %p428 = pneg %p70
        %p429 = pneg %p67
        %p430 = pneg %p91
        %p431 = pneg %p88
        %p432 = pneg %p112
        %p433 = pneg %p109
        %p434 = pneg %p133
        %p435 = pneg %p130
        %p436 = pneg %p154
        %p437 = pneg %p151
        %p438 = pneg %p175
        %p439 = pneg %p172
        %p440 = pneg %p196
        %p441 = pneg %p193
        %p442 = pneg %p217
        %p443 = pneg %p214
        %p444 = pneg %p238
        %p445 = pneg %p235
        %p446 = pneg %p259
        %p447 = pneg %p256
        %p448 = pneg %p280
        %p449 = pneg %p277
        %p450 = pneg %p301
        %p451 = pneg %p298
        %p452 = pneg %p322
        %p453 = pneg %p319
        %p454 = pneg %p348
        %p455 = pneg %p345
        %s456 = sand.u32 %s335, 1
        %s457 = scalar_lea.sflag [#allocation3], %s456
        %s458 = sand.u32 %s335, 1
        %s459 = scalar_lea.vmem [#allocation2], %s458
        %p460 = scmp.lt.s32.totalorder %s28, 1
        %s461 = scalar_select %p460, %s28, 1
        %s462 = smul.addr %s461, 8
        %s463 = smul.addr %s462, 8
        %s464 = scalar_lea.vmem %s0, %s463
        %v465 = vld [vmem:[%s464] sm:$0xff]
        %v466 = vld [vmem:[%s464 + $0x8] sm:$0xff]
        %v467 = vld [vmem:[%s464 + $0x10] sm:$0xff]
        %v468 = vld [vmem:[%s464 + $0x18] sm:$0xff]
        %v469 = vld [vmem:[%s464 + $0x20] sm:$0xff]
        %v470 = vld [vmem:[%s464 + $0x28] sm:$0xff]
        %v471 = vld [vmem:[%s464 + $0x30] sm:$0xff]
        %v472 = vld [vmem:[%s464 + $0x38] sm:$0xff]
        %v473 = vld [vmem:[%s1] sm:$0xff]
        %v474 = vld [vmem:[%s1 + $0x8] sm:$0xff]
        %v475 = vld [vmem:[%s1 + $0x10] sm:$0xff]
        %v476 = vld [vmem:[%s1 + $0x18] sm:$0xff]
        %v477 = vld [vmem:[%s1 + $0x20] sm:$0xff]
        %v478 = vld [vmem:[%s1 + $0x28] sm:$0xff]
        %v479 = vld [vmem:[%s1 + $0x30] sm:$0xff]
        %v480 = vld [vmem:[%s1 + $0x38] sm:$0xff]
        %v481 = vld [vmem:[%s1 + $0x40] sm:$0xff]
        %v482 = vld [vmem:[%s1 + $0x48] sm:$0xff]
        %v483 = vld [vmem:[%s1 + $0x50] sm:$0xff]
        %v484 = vld [vmem:[%s1 + $0x58] sm:$0xff]
        %v485 = vld [vmem:[%s1 + $0x60] sm:$0xff]
        %v486 = vld [vmem:[%s1 + $0x68] sm:$0xff]
        %v487 = vld [vmem:[%s1 + $0x70] sm:$0xff]
        %v488 = vld [vmem:[%s1 + $0x78] sm:$0xff]
        %v489 = vld [vmem:[%s2] sm:$0x1]
        %v491 = vperm.slane %v489, 0
        %493 = vmatpush.msra.mxu0 %v488
        %494 = vmatpush.msra.mxu0 %v487
        %495 = vmatpush.msra.mxu0 %v486
        %496 = vmatpush.msra.mxu0 %v485
        %497 = vmatpush.msra.mxu0 %v484
        %498 = vmatpush.msra.mxu0 %v483
        %499 = vmatpush.msra.mxu0 %v482
        %500 = vmatpush.msra.mxu0 %v481
        %501 = vmatpush.msra.mxu0 %v480
        %502 = vmatpush.msra.mxu0 %v479
        %503 = vmatpush.msra.mxu0 %v478
        %504 = vmatpush.msra.mxu0 %v477
        %505 = vmatpush.msra.mxu0 %v476
        %506 = vmatpush.msra.mxu0 %v475
        %507 = vmatpush.msra.mxu0 %v474
        %508 = vmatpush.msra.mxu0 %v473
        %509 = vmatmul.f32.gmra.mxu0 %v465
        %v510 = vpop.f32.mrf.mxu0
        %v511 = vadd.f32 %v491, %v510
        %512 = vmatmul.f32.gmra.mxu0 %v466
        %v513 = vpop.f32.mrf.mxu0
        %v514 = vadd.f32 %v491, %v513
        %515 = vmatmul.f32.gmra.mxu0 %v467
        %v516 = vpop.f32.mrf.mxu0
        %v517 = vadd.f32 %v491, %v516
        %518 = vmatmul.f32.gmra.mxu0 %v468
        %v519 = vpop.f32.mrf.mxu0
        %v520 = vadd.f32 %v491, %v519
        %521 = vmatmul.f32.gmra.mxu0 %v469
        %v522 = vpop.f32.mrf.mxu0
        %v523 = vadd.f32 %v491, %v522
        %524 = vmatmul.f32.gmra.mxu0 %v470
        %v525 = vpop.f32.mrf.mxu0
        %v526 = vadd.f32 %v491, %v525
        %527 = vmatmul.f32.gmra.mxu0 %v471
        %v528 = vpop.f32.mrf.mxu0
        %v529 = vadd.f32 %v491, %v528
        %530 = vmatmul.f32.gmra.mxu0 %v472
        %v531 = vpop.f32.mrf.mxu0
        %v532 = vadd.f32 %v491, %v531
        %533 = vdwg.mxu0
        %vm534 = vcmp.ge.f32.partialorder %v511, 0.0
        %vm535 = vcmp.ge.f32.partialorder %v514, 0.0
        %vm536 = vcmp.ge.f32.partialorder %v517, 0.0
        %vm537 = vcmp.ge.f32.partialorder %v520, 0.0
        %vm538 = vcmp.ge.f32.partialorder %v523, 0.0
        %vm539 = vcmp.ge.f32.partialorder %v526, 0.0
        %vm540 = vcmp.ge.f32.partialorder %v529, 0.0
        %vm541 = vcmp.ge.f32.partialorder %v532, 0.0
        %v542 = vmul.f32 %v511, 0.01
        %v543 = vmul.f32 %v514, 0.01
        %v544 = vmul.f32 %v517, 0.01
        %v545 = vmul.f32 %v520, 0.01
        %v546 = vmul.f32 %v523, 0.01
        %v547 = vmul.f32 %v526, 0.01
        %v548 = vmul.f32 %v529, 0.01
        %v549 = vmul.f32 %v532, 0.01
        %v550 = vsel %vm534, %v511, %v542
        %v551 = vsel %vm535, %v514, %v543
        %v552 = vsel %vm536, %v517, %v544
        %v553 = vsel %vm537, %v520, %v545
        %v554 = vsel %vm538, %v523, %v546
        %v555 = vsel %vm539, %v526, %v547
        %v556 = vsel %vm540, %v529, %v548
        %v557 = vsel %vm541, %v532, %v549
        %v558 = vld [vmem:[%s3] sm:$0xff]
        %v559 = vld [vmem:[%s3 + $0x8] sm:$0xff]
        %vm560 = vcmask 523264
        %v562 = vsel %vm560, %v558, 0
        %v565 = vsel %vm560, %v559, 0
        %567 = vmatpush.msra.mxu0 0.0
        %568 = vmatpush.msra.mxu0 0.0
        %569 = vmatpush.msra.mxu0 0.0
        %570 = vmatpush.msra.mxu0 0.0
        %571 = vmatpush.msra.mxu0 0.0
        %572 = vmatpush.msra.mxu0 0.0
        %573 = vmatpush.msra.mxu0 0.0
        %574 = vmatpush.msra.mxu0 0.0
        %575 = vmatpush.msra.mxu0 %v557
        %576 = vmatpush.msra.mxu0 %v556
        %577 = vmatpush.msra.mxu0 %v555
        %578 = vmatpush.msra.mxu0 %v554
        %579 = vmatpush.msra.mxu0 %v553
        %580 = vmatpush.msra.mxu0 %v552
        %581 = vmatpush.msra.mxu0 %v551
        %582 = vmatpush.msra.mxu0 %v550
        %583 = vmatmul.f32.gmra.mxu0 %v562
        %v584 = vpop.f32.mrf.mxu0
        %v585 = vadd.f32 0.0, %v584
        %586 = vmatmul.f32.gmra.mxu0 %v565
        %v587 = vpop.f32.mrf.mxu0
        %v588 = vadd.f32 0.0, %v587
        %589 = vdwg.mxu0
        %s590 = scalar_lea.vmem %s3, 16
        %v591 = vld [vmem:[%s590] sm:$0xff]
        %v592 = vld [vmem:[%s590 + $0x8] sm:$0xff]
        %v594 = vsel %vm560, %v591, 0
        %v597 = vsel %vm560, %v592, 0
        %599 = vmatpush.msra.mxu0 0.0
        %600 = vmatpush.msra.mxu0 0.0
        %601 = vmatpush.msra.mxu0 0.0
        %602 = vmatpush.msra.mxu0 0.0
        %603 = vmatpush.msra.mxu0 0.0
        %604 = vmatpush.msra.mxu0 0.0
        %605 = vmatpush.msra.mxu0 0.0
        %606 = vmatpush.msra.mxu0 0.0
        %607 = vmatpush.msra.mxu0 %v557
        %608 = vmatpush.msra.mxu0 %v556
        %609 = vmatpush.msra.mxu0 %v555
        %610 = vmatpush.msra.mxu0 %v554
        %611 = vmatpush.msra.mxu0 %v553
        %612 = vmatpush.msra.mxu0 %v552
        %613 = vmatpush.msra.mxu0 %v551
        %614 = vmatpush.msra.mxu0 %v550
        %615 = vmatmul.f32.gmra.mxu0 %v594
        %v616 = vpop.f32.mrf.mxu0
        %v617 = vadd.f32 0.0, %v616
        %618 = vmatmul.f32.gmra.mxu0 %v597
        %v619 = vpop.f32.mrf.mxu0
        %v620 = vadd.f32 0.0, %v619
        %621 = vdwg.mxu0
        %s622 = scalar_lea.vmem %s3, 32
        %v623 = vld [vmem:[%s622] sm:$0xff]
        %v624 = vld [vmem:[%s622 + $0x8] sm:$0xff]
        %v626 = vsel %vm560, %v623, 0
        %v629 = vsel %vm560, %v624, 0
        %631 = vmatpush.msra.mxu0 0.0
        %632 = vmatpush.msra.mxu0 0.0
        %633 = vmatpush.msra.mxu0 0.0
        %634 = vmatpush.msra.mxu0 0.0
        %635 = vmatpush.msra.mxu0 0.0
        %636 = vmatpush.msra.mxu0 0.0
        %637 = vmatpush.msra.mxu0 0.0
        %638 = vmatpush.msra.mxu0 0.0
        %639 = vmatpush.msra.mxu0 %v557
        %640 = vmatpush.msra.mxu0 %v556
        %641 = vmatpush.msra.mxu0 %v555
        %642 = vmatpush.msra.mxu0 %v554
        %643 = vmatpush.msra.mxu0 %v553
        %644 = vmatpush.msra.mxu0 %v552
        %645 = vmatpush.msra.mxu0 %v551
        %646 = vmatpush.msra.mxu0 %v550
        %647 = vmatmul.f32.gmra.mxu0 %v626
        %v648 = vpop.f32.mrf.mxu0
        %v649 = vadd.f32 0.0, %v648
        %650 = vmatmul.f32.gmra.mxu0 %v629
        %v651 = vpop.f32.mrf.mxu0
        %v652 = vadd.f32 0.0, %v651
        %653 = vdwg.mxu0
        %s654 = scalar_lea.vmem %s3, 48
        %v655 = vld [vmem:[%s654] sm:$0xff]
        %v656 = vld [vmem:[%s654 + $0x8] sm:$0xff]
        %v658 = vsel %vm560, %v655, 0
        %v661 = vsel %vm560, %v656, 0
        %663 = vmatpush.msra.mxu0 0.0
        %664 = vmatpush.msra.mxu0 0.0
        %665 = vmatpush.msra.mxu0 0.0
        %666 = vmatpush.msra.mxu0 0.0
        %667 = vmatpush.msra.mxu0 0.0
        %668 = vmatpush.msra.mxu0 0.0
        %669 = vmatpush.msra.mxu0 0.0
        %670 = vmatpush.msra.mxu0 0.0
        %671 = vmatpush.msra.mxu0 %v557
        %672 = vmatpush.msra.mxu0 %v556
        %673 = vmatpush.msra.mxu0 %v555
        %674 = vmatpush.msra.mxu0 %v554
        %675 = vmatpush.msra.mxu0 %v553
        %676 = vmatpush.msra.mxu0 %v552
        %677 = vmatpush.msra.mxu0 %v551
        %678 = vmatpush.msra.mxu0 %v550
        %679 = vmatmul.f32.gmra.mxu0 %v658
        %v680 = vpop.f32.mrf.mxu0
        %v681 = vadd.f32 0.0, %v680
        %682 = vmatmul.f32.gmra.mxu0 %v661
        %v683 = vpop.f32.mrf.mxu0
        %v684 = vadd.f32 0.0, %v683
        %685 = vdwg.mxu0
        %s686 = scalar_lea.vmem %s3, 64
        %v687 = vld [vmem:[%s686] sm:$0xff]
        %v688 = vld [vmem:[%s686 + $0x8] sm:$0xff]
        %v690 = vsel %vm560, %v687, 0
        %v693 = vsel %vm560, %v688, 0
        %695 = vmatpush.msra.mxu0 0.0
        %696 = vmatpush.msra.mxu0 0.0
        %697 = vmatpush.msra.mxu0 0.0
        %698 = vmatpush.msra.mxu0 0.0
        %699 = vmatpush.msra.mxu0 0.0
        %700 = vmatpush.msra.mxu0 0.0
        %701 = vmatpush.msra.mxu0 0.0
        %702 = vmatpush.msra.mxu0 0.0
        %703 = vmatpush.msra.mxu0 %v557
        %704 = vmatpush.msra.mxu0 %v556
        %705 = vmatpush.msra.mxu0 %v555
        %706 = vmatpush.msra.mxu0 %v554
        %707 = vmatpush.msra.mxu0 %v553
        %708 = vmatpush.msra.mxu0 %v552
        %709 = vmatpush.msra.mxu0 %v551
        %710 = vmatpush.msra.mxu0 %v550
        %711 = vmatmul.f32.gmra.mxu0 %v690
        %v712 = vpop.f32.mrf.mxu0
        %v713 = vadd.f32 0.0, %v712
        %714 = vmatmul.f32.gmra.mxu0 %v693
        %v715 = vpop.f32.mrf.mxu0
        %v716 = vadd.f32 0.0, %v715
        %717 = vdwg.mxu0
        %s718 = scalar_lea.vmem %s3, 80
        %v719 = vld [vmem:[%s718] sm:$0xff]
        %v720 = vld [vmem:[%s718 + $0x8] sm:$0xff]
        %v722 = vsel %vm560, %v719, 0
        %v725 = vsel %vm560, %v720, 0
        %727 = vmatpush.msra.mxu0 0.0
        %728 = vmatpush.msra.mxu0 0.0
        %729 = vmatpush.msra.mxu0 0.0
        %730 = vmatpush.msra.mxu0 0.0
        %731 = vmatpush.msra.mxu0 0.0
        %732 = vmatpush.msra.mxu0 0.0
        %733 = vmatpush.msra.mxu0 0.0
        %734 = vmatpush.msra.mxu0 0.0
        %735 = vmatpush.msra.mxu0 %v557
        %736 = vmatpush.msra.mxu0 %v556
        %737 = vmatpush.msra.mxu0 %v555
        %738 = vmatpush.msra.mxu0 %v554
        %739 = vmatpush.msra.mxu0 %v553
        %740 = vmatpush.msra.mxu0 %v552
        %741 = vmatpush.msra.mxu0 %v551
        %742 = vmatpush.msra.mxu0 %v550
        %743 = vmatmul.f32.gmra.mxu0 %v722
        %v744 = vpop.f32.mrf.mxu0
        %v745 = vadd.f32 0.0, %v744
        %746 = vmatmul.f32.gmra.mxu0 %v725
        %v747 = vpop.f32.mrf.mxu0
        %v748 = vadd.f32 0.0, %v747
        %749 = vdwg.mxu0
        %s750 = scalar_lea.vmem %s3, 96
        %v751 = vld [vmem:[%s750] sm:$0xff]
        %v752 = vld [vmem:[%s750 + $0x8] sm:$0xff]
        %v754 = vsel %vm560, %v751, 0
        %v757 = vsel %vm560, %v752, 0
        %759 = vmatpush.msra.mxu0 0.0
        %760 = vmatpush.msra.mxu0 0.0
        %761 = vmatpush.msra.mxu0 0.0
        %762 = vmatpush.msra.mxu0 0.0
        %763 = vmatpush.msra.mxu0 0.0
        %764 = vmatpush.msra.mxu0 0.0
        %765 = vmatpush.msra.mxu0 0.0
        %766 = vmatpush.msra.mxu0 0.0
        %767 = vmatpush.msra.mxu0 %v557
        %768 = vmatpush.msra.mxu0 %v556
        %769 = vmatpush.msra.mxu0 %v555
        %770 = vmatpush.msra.mxu0 %v554
        %771 = vmatpush.msra.mxu0 %v553
        %772 = vmatpush.msra.mxu0 %v552
        %773 = vmatpush.msra.mxu0 %v551
        %774 = vmatpush.msra.mxu0 %v550
        %775 = vmatmul.f32.gmra.mxu0 %v754
        %v776 = vpop.f32.mrf.mxu0
        %v777 = vadd.f32 0.0, %v776
        %778 = vmatmul.f32.gmra.mxu0 %v757
        %v779 = vpop.f32.mrf.mxu0
        %v780 = vadd.f32 0.0, %v779
        %781 = vdwg.mxu0
        %s782 = scalar_lea.vmem %s3, 112
        %v783 = vld [vmem:[%s782] sm:$0xff]
        %v784 = vld [vmem:[%s782 + $0x8] sm:$0xff]
        %v786 = vsel %vm560, %v783, 0
        %v789 = vsel %vm560, %v784, 0
        %791 = vmatpush.msra.mxu0 0.0
        %792 = vmatpush.msra.mxu0 0.0
        %793 = vmatpush.msra.mxu0 0.0
        %794 = vmatpush.msra.mxu0 0.0
        %795 = vmatpush.msra.mxu0 0.0
        %796 = vmatpush.msra.mxu0 0.0
        %797 = vmatpush.msra.mxu0 0.0
        %798 = vmatpush.msra.mxu0 0.0
        %799 = vmatpush.msra.mxu0 %v557
        %800 = vmatpush.msra.mxu0 %v556
        %801 = vmatpush.msra.mxu0 %v555
        %802 = vmatpush.msra.mxu0 %v554
        %803 = vmatpush.msra.mxu0 %v553
        %804 = vmatpush.msra.mxu0 %v552
        %805 = vmatpush.msra.mxu0 %v551
        %806 = vmatpush.msra.mxu0 %v550
        %807 = vmatmul.f32.gmra.mxu0 %v786
        %v808 = vpop.f32.mrf.mxu0
        %v809 = vadd.f32 0.0, %v808
        %810 = vmatmul.f32.gmra.mxu0 %v789
        %v811 = vpop.f32.mrf.mxu0
        %v812 = vadd.f32 0.0, %v811
        %813 = vdwg.mxu0
        %s814 = scalar_lea.vmem %s3, 128
        %v815 = vld [vmem:[%s814] sm:$0xff]
        %v816 = vld [vmem:[%s814 + $0x8] sm:$0xff]
        %v818 = vsel %vm560, %v815, 0
        %v821 = vsel %vm560, %v816, 0
        %823 = vmatpush.msra.mxu0 0.0
        %824 = vmatpush.msra.mxu0 0.0
        %825 = vmatpush.msra.mxu0 0.0
        %826 = vmatpush.msra.mxu0 0.0
        %827 = vmatpush.msra.mxu0 0.0
        %828 = vmatpush.msra.mxu0 0.0
        %829 = vmatpush.msra.mxu0 0.0
        %830 = vmatpush.msra.mxu0 0.0
        %831 = vmatpush.msra.mxu0 %v557
        %832 = vmatpush.msra.mxu0 %v556
        %833 = vmatpush.msra.mxu0 %v555
        %834 = vmatpush.msra.mxu0 %v554
        %835 = vmatpush.msra.mxu0 %v553
        %836 = vmatpush.msra.mxu0 %v552
        %837 = vmatpush.msra.mxu0 %v551
        %838 = vmatpush.msra.mxu0 %v550
        %839 = vmatmul.f32.gmra.mxu0 %v818
        %v840 = vpop.f32.mrf.mxu0
        %v841 = vadd.f32 0.0, %v840
        %842 = vmatmul.f32.gmra.mxu0 %v821
        %v843 = vpop.f32.mrf.mxu0
        %v844 = vadd.f32 0.0, %v843
        %845 = vdwg.mxu0
        %v846 = vld [vmem:[%s4] sm:$0xff]
        %v847 = vld [vmem:[%s4 + $0x8] sm:$0xff]
        %v848 = vld [vmem:[%s4 + $0x10] sm:$0xff]
        %v849 = vld [vmem:[%s4 + $0x18] sm:$0xff]
        %v850 = vld [vmem:[%s4 + $0x20] sm:$0xff]
        %v851 = vld [vmem:[%s4 + $0x28] sm:$0xff]
        %v852 = vld [vmem:[%s4 + $0x30] sm:$0xff]
        %v853 = vld [vmem:[%s4 + $0x38] sm:$0xff]
        %v854 = vld [vmem:[%s4 + $0x40] sm:$0xff]
        %v855 = vld [vmem:[%s4 + $0x48] sm:$0xff]
        %v856 = vld [vmem:[%s4 + $0x50] sm:$0xff]
        %v857 = vld [vmem:[%s4 + $0x58] sm:$0xff]
        %v858 = vld [vmem:[%s4 + $0x60] sm:$0xff]
        %v859 = vld [vmem:[%s4 + $0x68] sm:$0xff]
        %v860 = vld [vmem:[%s4 + $0x70] sm:$0xff]
        %v861 = vld [vmem:[%s4 + $0x78] sm:$0xff]
        %v862 = vld [vmem:[%s4 + $0x80] sm:$0xff]
        %v863 = vld [vmem:[%s4 + $0x88] sm:$0xff]
        %v864 = vld [vmem:[%s4 + $0x90] sm:$0xff]
        %v865 = vld [vmem:[%s4 + $0x98] sm:$0xff]
        %v866 = vld [vmem:[%s4 + $0xa0] sm:$0xff]
        %v867 = vld [vmem:[%s4 + $0xa8] sm:$0xff]
        %v868 = vld [vmem:[%s4 + $0xb0] sm:$0xff]
        %v869 = vld [vmem:[%s4 + $0xb8] sm:$0xff]
        %v870 = vld [vmem:[%s4 + $0xc0] sm:$0xff]
        %v871 = vld [vmem:[%s4 + $0xc8] sm:$0xff]
        %v872 = vld [vmem:[%s4 + $0xd0] sm:$0xff]
        %v873 = vld [vmem:[%s4 + $0xd8] sm:$0xff]
        %v874 = vld [vmem:[%s4 + $0xe0] sm:$0xff]
        %v875 = vld [vmem:[%s4 + $0xe8] sm:$0xff]
        %v876 = vld [vmem:[%s4 + $0xf0] sm:$0xff]
        %v877 = vld [vmem:[%s4 + $0xf8] sm:$0xff]
        %v878 = vld [vmem:[%s4 + $0x100] sm:$0xff]
        %v879 = vld [vmem:[%s4 + $0x108] sm:$0xff]
        %v880 = vld [vmem:[%s4 + $0x110] sm:$0xff]
        %v881 = vld [vmem:[%s4 + $0x118] sm:$0xff]
        %v882 = vld [vmem:[%s4 + $0x120] sm:$0xff]
        %v883 = vld [vmem:[%s4 + $0x128] sm:$0xff]
        %v884 = vld [vmem:[%s4 + $0x130] sm:$0xff]
        %v885 = vld [vmem:[%s4 + $0x138] sm:$0xff]
        %v886 = vld [vmem:[%s4 + $0x140] sm:$0xff]
        %v887 = vld [vmem:[%s4 + $0x148] sm:$0xff]
        %v888 = vld [vmem:[%s4 + $0x150] sm:$0xff]
        %v889 = vld [vmem:[%s4 + $0x158] sm:$0xff]
        %v890 = vld [vmem:[%s4 + $0x160] sm:$0xff]
        %v891 = vld [vmem:[%s4 + $0x168] sm:$0xff]
        %v892 = vld [vmem:[%s4 + $0x170] sm:$0xff]
        %v893 = vld [vmem:[%s4 + $0x178] sm:$0xff]
        %v894 = vld [vmem:[%s4 + $0x180] sm:$0xff]
        %v895 = vld [vmem:[%s4 + $0x188] sm:$0xff]
        %v896 = vld [vmem:[%s4 + $0x190] sm:$0xff]
        %v897 = vld [vmem:[%s4 + $0x198] sm:$0xff]
        %v898 = vld [vmem:[%s4 + $0x1a0] sm:$0xff]
        %v899 = vld [vmem:[%s4 + $0x1a8] sm:$0xff]
        %v900 = vld [vmem:[%s4 + $0x1b0] sm:$0xff]
        %v901 = vld [vmem:[%s4 + $0x1b8] sm:$0xff]
        %v902 = vld [vmem:[%s4 + $0x1c0] sm:$0xff]
        %v903 = vld [vmem:[%s4 + $0x1c8] sm:$0xff]
        %v904 = vld [vmem:[%s4 + $0x1d0] sm:$0xff]
        %v905 = vld [vmem:[%s4 + $0x1d8] sm:$0xff]
        %v906 = vld [vmem:[%s4 + $0x1e0] sm:$0xff]
        %v907 = vld [vmem:[%s4 + $0x1e8] sm:$0xff]
        %v908 = vld [vmem:[%s4 + $0x1f0] sm:$0xff]
        %v909 = vld [vmem:[%s4 + $0x1f8] sm:$0xff]
        %v910 = vld [vmem:[%s4 + $0x200] sm:$0xff]
        %v911 = vld [vmem:[%s4 + $0x208] sm:$0xff]
        %v912 = vld [vmem:[%s4 + $0x210] sm:$0xff]
        %v913 = vld [vmem:[%s4 + $0x218] sm:$0xff]
        %v914 = vld [vmem:[%s4 + $0x220] sm:$0xff]
        %v915 = vld [vmem:[%s4 + $0x228] sm:$0xff]
        %v916 = vld [vmem:[%s4 + $0x230] sm:$0xff]
        %v917 = vld [vmem:[%s4 + $0x238] sm:$0xff]
        %v918 = vld [vmem:[%s4 + $0x240] sm:$0xff]
        %v919 = vld [vmem:[%s4 + $0x248] sm:$0xff]
        %v920 = vld [vmem:[%s4 + $0x250] sm:$0xff]
        %v921 = vld [vmem:[%s4 + $0x258] sm:$0xff]
        %v922 = vld [vmem:[%s4 + $0x260] sm:$0xff]
        %v923 = vld [vmem:[%s4 + $0x268] sm:$0xff]
        %v924 = vld [vmem:[%s4 + $0x270] sm:$0xff]
        %v925 = vld [vmem:[%s4 + $0x278] sm:$0xff]
        %v926 = vld [vmem:[%s4 + $0x280] sm:$0xff]
        %v927 = vld [vmem:[%s4 + $0x288] sm:$0xff]
        %v928 = vld [vmem:[%s4 + $0x290] sm:$0xff]
        %v929 = vld [vmem:[%s4 + $0x298] sm:$0xff]
        %v930 = vld [vmem:[%s4 + $0x2a0] sm:$0xff]
        %v931 = vld [vmem:[%s4 + $0x2a8] sm:$0xff]
        %v932 = vld [vmem:[%s4 + $0x2b0] sm:$0xff]
        %v933 = vld [vmem:[%s4 + $0x2b8] sm:$0xff]
        %v934 = vld [vmem:[%s4 + $0x2c0] sm:$0xff]
        %v935 = vld [vmem:[%s4 + $0x2c8] sm:$0xff]
        %v936 = vld [vmem:[%s4 + $0x2d0] sm:$0xff]
        %v937 = vld [vmem:[%s4 + $0x2d8] sm:$0xff]
        %v938 = vld [vmem:[%s4 + $0x2e0] sm:$0xff]
        %v939 = vld [vmem:[%s4 + $0x2e8] sm:$0xff]
        %v940 = vld [vmem:[%s4 + $0x2f0] sm:$0xff]
        %v941 = vld [vmem:[%s4 + $0x2f8] sm:$0xff]
        %v942 = vld [vmem:[%s4 + $0x300] sm:$0xff]
        %v943 = vld [vmem:[%s4 + $0x308] sm:$0xff]
        %v944 = vld [vmem:[%s4 + $0x310] sm:$0xff]
        %v945 = vld [vmem:[%s4 + $0x318] sm:$0xff]
        %v946 = vld [vmem:[%s4 + $0x320] sm:$0xff]
        %v947 = vld [vmem:[%s4 + $0x328] sm:$0xff]
        %v948 = vld [vmem:[%s4 + $0x330] sm:$0xff]
        %v949 = vld [vmem:[%s4 + $0x338] sm:$0xff]
        %v950 = vld [vmem:[%s4 + $0x340] sm:$0xff]
        %v951 = vld [vmem:[%s4 + $0x348] sm:$0xff]
        %v952 = vld [vmem:[%s4 + $0x350] sm:$0xff]
        %v953 = vld [vmem:[%s4 + $0x358] sm:$0xff]
        %v954 = vld [vmem:[%s4 + $0x360] sm:$0xff]
        %v955 = vld [vmem:[%s4 + $0x368] sm:$0xff]
        %v956 = vld [vmem:[%s4 + $0x370] sm:$0xff]
        %v957 = vld [vmem:[%s4 + $0x378] sm:$0xff]
        %v958 = vld [vmem:[%s4 + $0x380] sm:$0xff]
        %v959 = vld [vmem:[%s4 + $0x388] sm:$0xff]
        %v960 = vld [vmem:[%s4 + $0x390] sm:$0xff]
        %v961 = vld [vmem:[%s4 + $0x398] sm:$0xff]
        %v962 = vld [vmem:[%s4 + $0x3a0] sm:$0xff]
        %v963 = vld [vmem:[%s4 + $0x3a8] sm:$0xff]
        %v964 = vld [vmem:[%s4 + $0x3b0] sm:$0xff]
        %v965 = vld [vmem:[%s4 + $0x3b8] sm:$0xff]
        %v966 = vld [vmem:[%s4 + $0x3c0] sm:$0xff]
        %v967 = vld [vmem:[%s4 + $0x3c8] sm:$0xff]
        %v968 = vld [vmem:[%s4 + $0x3d0] sm:$0xff]
        %v969 = vld [vmem:[%s4 + $0x3d8] sm:$0xff]
        %v970 = vld [vmem:[%s4 + $0x3e0] sm:$0xff]
        %v971 = vld [vmem:[%s4 + $0x3e8] sm:$0xff]
        %v972 = vld [vmem:[%s4 + $0x3f0] sm:$0xff]
        %v973 = vld [vmem:[%s4 + $0x3f8] sm:$0xff]
        %v974 = vld [vmem:[%s4 + $0x400] sm:$0xff]
        %v975 = vld [vmem:[%s4 + $0x408] sm:$0xff]
        %v976 = vld [vmem:[%s4 + $0x410] sm:$0xff]
        %v977 = vld [vmem:[%s4 + $0x418] sm:$0xff]
        %v978 = vld [vmem:[%s4 + $0x420] sm:$0xff]
        %v979 = vld [vmem:[%s4 + $0x428] sm:$0xff]
        %v980 = vld [vmem:[%s4 + $0x430] sm:$0xff]
        %v981 = vld [vmem:[%s4 + $0x438] sm:$0xff]
        %v982 = vld [vmem:[%s4 + $0x440] sm:$0xff]
        %v983 = vld [vmem:[%s4 + $0x448] sm:$0xff]
        %v984 = vld [vmem:[%s4 + $0x450] sm:$0xff]
        %v985 = vld [vmem:[%s4 + $0x458] sm:$0xff]
        %v986 = vld [vmem:[%s4 + $0x460] sm:$0xff]
        %v987 = vld [vmem:[%s4 + $0x468] sm:$0xff]
        %v988 = vld [vmem:[%s4 + $0x470] sm:$0xff]
        %v989 = vld [vmem:[%s4 + $0x478] sm:$0xff]
        %v990 = vld [vmem:[%s5] sm:$0x1]
        %v992 = vperm.slane %v990, 0
        %994 = vmatpush.msra.mxu0 %v861
        %995 = vmatpush.msra.mxu0 %v860
        %996 = vmatpush.msra.mxu0 %v859
        %997 = vmatpush.msra.mxu0 %v858
        %998 = vmatpush.msra.mxu0 %v857
        %999 = vmatpush.msra.mxu0 %v856
        %1000 = vmatpush.msra.mxu0 %v855
        %1001 = vmatpush.msra.mxu0 %v854
        %1002 = vmatpush.msra.mxu0 %v853
        %1003 = vmatpush.msra.mxu0 %v852
        %1004 = vmatpush.msra.mxu0 %v851
        %1005 = vmatpush.msra.mxu0 %v850
        %1006 = vmatpush.msra.mxu0 %v849
        %1007 = vmatpush.msra.mxu0 %v848
        %1008 = vmatpush.msra.mxu0 %v847
        %1009 = vmatpush.msra.mxu0 %v846
        %1010 = vmatmul.f32.gmra.mxu0 %v585
        %v1011 = vpop.f32.mrf.mxu0
        %v1012 = vadd.f32 %v992, %v1011
        %1013 = vmatmul.f32.gmra.mxu0 %v588
        %v1014 = vpop.f32.mrf.mxu0
        %v1015 = vadd.f32 %v992, %v1014
        %1016 = vdwg.mxu0
        %1017 = vmatpush.msra.mxu0 %v877
        %1018 = vmatpush.msra.mxu0 %v876
        %1019 = vmatpush.msra.mxu0 %v875
        %1020 = vmatpush.msra.mxu0 %v874
        %1021 = vmatpush.msra.mxu0 %v873
        %1022 = vmatpush.msra.mxu0 %v872
        %1023 = vmatpush.msra.mxu0 %v871
        %1024 = vmatpush.msra.mxu0 %v870
        %1025 = vmatpush.msra.mxu0 %v869
        %1026 = vmatpush.msra.mxu0 %v868
        %1027 = vmatpush.msra.mxu0 %v867
        %1028 = vmatpush.msra.mxu0 %v866
        %1029 = vmatpush.msra.mxu0 %v865
        %1030 = vmatpush.msra.mxu0 %v864
        %1031 = vmatpush.msra.mxu0 %v863
        %1032 = vmatpush.msra.mxu0 %v862
        %1033 = vmatmul.f32.gmra.mxu0 %v617
        %v1034 = vpop.f32.mrf.mxu0
        %v1035 = vadd.f32 %v1012, %v1034
        %1036 = vmatmul.f32.gmra.mxu0 %v620
        %v1037 = vpop.f32.mrf.mxu0
        %v1038 = vadd.f32 %v1015, %v1037
        %1039 = vdwg.mxu0
        %1040 = vmatpush.msra.mxu0 %v893
        %1041 = vmatpush.msra.mxu0 %v892
        %1042 = vmatpush.msra.mxu0 %v891
        %1043 = vmatpush.msra.mxu0 %v890
        %1044 = vmatpush.msra.mxu0 %v889
        %1045 = vmatpush.msra.mxu0 %v888
        %1046 = vmatpush.msra.mxu0 %v887
        %1047 = vmatpush.msra.mxu0 %v886
        %1048 = vmatpush.msra.mxu0 %v885
        %1049 = vmatpush.msra.mxu0 %v884
        %1050 = vmatpush.msra.mxu0 %v883
        %1051 = vmatpush.msra.mxu0 %v882
        %1052 = vmatpush.msra.mxu0 %v881
        %1053 = vmatpush.msra.mxu0 %v880
        %1054 = vmatpush.msra.mxu0 %v879
        %1055 = vmatpush.msra.mxu0 %v878
        %1056 = vmatmul.f32.gmra.mxu0 %v649
        %v1057 = vpop.f32.mrf.mxu0
        %v1058 = vadd.f32 %v1035, %v1057
        %1059 = vmatmul.f32.gmra.mxu0 %v652
        %v1060 = vpop.f32.mrf.mxu0
        %v1061 = vadd.f32 %v1038, %v1060
        %1062 = vdwg.mxu0
        %1063 = vmatpush.msra.mxu0 %v909
        %1064 = vmatpush.msra.mxu0 %v908
        %1065 = vmatpush.msra.mxu0 %v907
        %1066 = vmatpush.msra.mxu0 %v906
        %1067 = vmatpush.msra.mxu0 %v905
        %1068 = vmatpush.msra.mxu0 %v904
        %1069 = vmatpush.msra.mxu0 %v903
        %1070 = vmatpush.msra.mxu0 %v902
        %1071 = vmatpush.msra.mxu0 %v901
        %1072 = vmatpush.msra.mxu0 %v900
        %1073 = vmatpush.msra.mxu0 %v899
        %1074 = vmatpush.msra.mxu0 %v898
        %1075 = vmatpush.msra.mxu0 %v897
        %1076 = vmatpush.msra.mxu0 %v896
        %1077 = vmatpush.msra.mxu0 %v895
        %1078 = vmatpush.msra.mxu0 %v894
        %1079 = vmatmul.f32.gmra.mxu0 %v681
        %v1080 = vpop.f32.mrf.mxu0
        %v1081 = vadd.f32 %v1058, %v1080
        %1082 = vmatmul.f32.gmra.mxu0 %v684
        %v1083 = vpop.f32.mrf.mxu0
        %v1084 = vadd.f32 %v1061, %v1083
        %1085 = vdwg.mxu0
        %1086 = vmatpush.msra.mxu0 %v925
        %1087 = vmatpush.msra.mxu0 %v924
        %1088 = vmatpush.msra.mxu0 %v923
        %1089 = vmatpush.msra.mxu0 %v922
        %1090 = vmatpush.msra.mxu0 %v921
        %1091 = vmatpush.msra.mxu0 %v920
        %1092 = vmatpush.msra.mxu0 %v919
        %1093 = vmatpush.msra.mxu0 %v918
        %1094 = vmatpush.msra.mxu0 %v917
        %1095 = vmatpush.msra.mxu0 %v916
        %1096 = vmatpush.msra.mxu0 %v915
        %1097 = vmatpush.msra.mxu0 %v914
        %1098 = vmatpush.msra.mxu0 %v913
        %1099 = vmatpush.msra.mxu0 %v912
        %1100 = vmatpush.msra.mxu0 %v911
        %1101 = vmatpush.msra.mxu0 %v910
        %1102 = vmatmul.f32.gmra.mxu0 %v713
        %v1103 = vpop.f32.mrf.mxu0
        %v1104 = vadd.f32 %v1081, %v1103
        %1105 = vmatmul.f32.gmra.mxu0 %v716
        %v1106 = vpop.f32.mrf.mxu0
        %v1107 = vadd.f32 %v1084, %v1106
        %1108 = vdwg.mxu0
        %1109 = vmatpush.msra.mxu0 %v941
        %1110 = vmatpush.msra.mxu0 %v940
        %1111 = vmatpush.msra.mxu0 %v939
        %1112 = vmatpush.msra.mxu0 %v938
        %1113 = vmatpush.msra.mxu0 %v937
        %1114 = vmatpush.msra.mxu0 %v936
        %1115 = vmatpush.msra.mxu0 %v935
        %1116 = vmatpush.msra.mxu0 %v934
        %1117 = vmatpush.msra.mxu0 %v933
        %1118 = vmatpush.msra.mxu0 %v932
        %1119 = vmatpush.msra.mxu0 %v931
        %1120 = vmatpush.msra.mxu0 %v930
        %1121 = vmatpush.msra.mxu0 %v929
        %1122 = vmatpush.msra.mxu0 %v928
        %1123 = vmatpush.msra.mxu0 %v927
        %1124 = vmatpush.msra.mxu0 %v926
        %1125 = vmatmul.f32.gmra.mxu0 %v745
        %v1126 = vpop.f32.mrf.mxu0
        %v1127 = vadd.f32 %v1104, %v1126
        %1128 = vmatmul.f32.gmra.mxu0 %v748
        %v1129 = vpop.f32.mrf.mxu0
        %v1130 = vadd.f32 %v1107, %v1129
        %1131 = vdwg.mxu0
        %1132 = vmatpush.msra.mxu0 %v957
        %1133 = vmatpush.msra.mxu0 %v956
        %1134 = vmatpush.msra.mxu0 %v955
        %1135 = vmatpush.msra.mxu0 %v954
        %1136 = vmatpush.msra.mxu0 %v953
        %1137 = vmatpush.msra.mxu0 %v952
        %1138 = vmatpush.msra.mxu0 %v951
        %1139 = vmatpush.msra.mxu0 %v950
        %1140 = vmatpush.msra.mxu0 %v949
        %1141 = vmatpush.msra.mxu0 %v948
        %1142 = vmatpush.msra.mxu0 %v947
        %1143 = vmatpush.msra.mxu0 %v946
        %1144 = vmatpush.msra.mxu0 %v945
        %1145 = vmatpush.msra.mxu0 %v944
        %1146 = vmatpush.msra.mxu0 %v943
        %1147 = vmatpush.msra.mxu0 %v942
        %1148 = vmatmul.f32.gmra.mxu0 %v777
        %v1149 = vpop.f32.mrf.mxu0
        %v1150 = vadd.f32 %v1127, %v1149
        %1151 = vmatmul.f32.gmra.mxu0 %v780
        %v1152 = vpop.f32.mrf.mxu0
        %v1153 = vadd.f32 %v1130, %v1152
        %1154 = vdwg.mxu0
        %1155 = vmatpush.msra.mxu0 %v973
        %1156 = vmatpush.msra.mxu0 %v972
        %1157 = vmatpush.msra.mxu0 %v971
        %1158 = vmatpush.msra.mxu0 %v970
        %1159 = vmatpush.msra.mxu0 %v969
        %1160 = vmatpush.msra.mxu0 %v968
        %1161 = vmatpush.msra.mxu0 %v967
        %1162 = vmatpush.msra.mxu0 %v966
        %1163 = vmatpush.msra.mxu0 %v965
        %1164 = vmatpush.msra.mxu0 %v964
        %1165 = vmatpush.msra.mxu0 %v963
        %1166 = vmatpush.msra.mxu0 %v962
        %1167 = vmatpush.msra.mxu0 %v961
        %1168 = vmatpush.msra.mxu0 %v960
        %1169 = vmatpush.msra.mxu0 %v959
        %1170 = vmatpush.msra.mxu0 %v958
        %1171 = vmatmul.f32.gmra.mxu0 %v809
        %v1172 = vpop.f32.mrf.mxu0
        %v1173 = vadd.f32 %v1150, %v1172
        %1174 = vmatmul.f32.gmra.mxu0 %v812
        %v1175 = vpop.f32.mrf.mxu0
        %v1176 = vadd.f32 %v1153, %v1175
        %1177 = vdwg.mxu0
        %1178 = vmatpush.msra.mxu0 %v989
        %1179 = vmatpush.msra.mxu0 %v988
        %1180 = vmatpush.msra.mxu0 %v987
        %1181 = vmatpush.msra.mxu0 %v986
        %1182 = vmatpush.msra.mxu0 %v985
        %1183 = vmatpush.msra.mxu0 %v984
        %1184 = vmatpush.msra.mxu0 %v983
        %1185 = vmatpush.msra.mxu0 %v982
        %1186 = vmatpush.msra.mxu0 %v981
        %1187 = vmatpush.msra.mxu0 %v980
        %1188 = vmatpush.msra.mxu0 %v979
        %1189 = vmatpush.msra.mxu0 %v978
        %1190 = vmatpush.msra.mxu0 %v977
        %1191 = vmatpush.msra.mxu0 %v976
        %1192 = vmatpush.msra.mxu0 %v975
        %1193 = vmatpush.msra.mxu0 %v974
        %1194 = vmatmul.f32.gmra.mxu0 %v841
        %v1195 = vpop.f32.mrf.mxu0
        %v1196 = vadd.f32 %v1173, %v1195
        %1197 = vmatmul.f32.gmra.mxu0 %v844
        %v1198 = vpop.f32.mrf.mxu0
        %v1199 = vadd.f32 %v1176, %v1198
        %1200 = vdwg.mxu0
        %vm1201 = vcmp.ge.f32.partialorder %v1196, 0.0
        %vm1202 = vcmp.ge.f32.partialorder %v1199, 0.0
        %v1203 = vmul.f32 %v1196, 0.01
        %v1204 = vmul.f32 %v1199, 0.01
        %v1205 = vsel %vm1201, %v1196, %v1203
        %v1206 = vsel %vm1202, %v1199, %v1204
        %v1207 = vld [vmem:[%s6] sm:$0xf]
        %vm1208 = vcmask 130048
        %v1210 = vsel %vm1208, %v1207, 0
        %1212 = vmatpush.msra.mxu0 0.0
        %1213 = vmatpush.msra.mxu0 0.0
        %1214 = vmatpush.msra.mxu0 0.0
        %1215 = vmatpush.msra.mxu0 0.0
        %1216 = vmatpush.msra.mxu0 0.0
        %1217 = vmatpush.msra.mxu0 0.0
        %1218 = vmatpush.msra.mxu0 0.0
        %1219 = vmatpush.msra.mxu0 0.0
        %1220 = vmatpush.msra.mxu0 0.0
        %1221 = vmatpush.msra.mxu0 0.0
        %1222 = vmatpush.msra.mxu0 0.0
        %1223 = vmatpush.msra.mxu0 0.0
        %1224 = vmatpush.msra.mxu0 0.0
        %1225 = vmatpush.msra.mxu0 0.0
        %1226 = vmatpush.msra.mxu0 %v1206
        %1227 = vmatpush.msra.mxu0 %v1205
        %1228 = vmatmul.f32.gmra.mxu0 %v1210
        %v1229 = vpop.f32.mrf.mxu0
        %v1230 = vadd.f32 0.0, %v1229
        %1231 = vdwg.mxu0
        %s1232 = scalar_lea.vmem %s6, 4
        %v1233 = vld [vmem:[%s1232] sm:$0xf]
        %v1235 = vsel %vm1208, %v1233, 0
        %1237 = vmatpush.msra.mxu0 0.0
        %1238 = vmatpush.msra.mxu0 0.0
        %1239 = vmatpush.msra.mxu0 0.0
        %1240 = vmatpush.msra.mxu0 0.0
        %1241 = vmatpush.msra.mxu0 0.0
        %1242 = vmatpush.msra.mxu0 0.0
        %1243 = vmatpush.msra.mxu0 0.0
        %1244 = vmatpush.msra.mxu0 0.0
        %1245 = vmatpush.msra.mxu0 0.0
        %1246 = vmatpush.msra.mxu0 0.0
        %1247 = vmatpush.msra.mxu0 0.0
        %1248 = vmatpush.msra.mxu0 0.0
        %1249 = vmatpush.msra.mxu0 0.0
        %1250 = vmatpush.msra.mxu0 0.0
        %1251 = vmatpush.msra.mxu0 %v1206
        %1252 = vmatpush.msra.mxu0 %v1205
        %1253 = vmatmul.f32.gmra.mxu0 %v1235
        %v1254 = vpop.f32.mrf.mxu0
        %v1255 = vadd.f32 0.0, %v1254
        %1256 = vdwg.mxu0
        %s1257 = scalar_lea.vmem %s6, 8
        %v1258 = vld [vmem:[%s1257] sm:$0xf]
        %v1260 = vsel %vm1208, %v1258, 0
        %1262 = vmatpush.msra.mxu0 0.0
        %1263 = vmatpush.msra.mxu0 0.0
        %1264 = vmatpush.msra.mxu0 0.0
        %1265 = vmatpush.msra.mxu0 0.0
        %1266 = vmatpush.msra.mxu0 0.0
        %1267 = vmatpush.msra.mxu0 0.0
        %1268 = vmatpush.msra.mxu0 0.0
        %1269 = vmatpush.msra.mxu0 0.0
        %1270 = vmatpush.msra.mxu0 0.0
        %1271 = vmatpush.msra.mxu0 0.0
        %1272 = vmatpush.msra.mxu0 0.0
        %1273 = vmatpush.msra.mxu0 0.0
        %1274 = vmatpush.msra.mxu0 0.0
        %1275 = vmatpush.msra.mxu0 0.0
        %1276 = vmatpush.msra.mxu0 %v1206
        %1277 = vmatpush.msra.mxu0 %v1205
        %1278 = vmatmul.f32.gmra.mxu0 %v1260
        %v1279 = vpop.f32.mrf.mxu0
        %v1280 = vadd.f32 0.0, %v1279
        %1281 = vdwg.mxu0
        %s1282 = scalar_lea.vmem %s6, 12
        %v1283 = vld [vmem:[%s1282] sm:$0xf]
        %v1285 = vsel %vm1208, %v1283, 0
        %1287 = vmatpush.msra.mxu0 0.0
        %1288 = vmatpush.msra.mxu0 0.0
        %1289 = vmatpush.msra.mxu0 0.0
        %1290 = vmatpush.msra.mxu0 0.0
        %1291 = vmatpush.msra.mxu0 0.0
        %1292 = vmatpush.msra.mxu0 0.0
        %1293 = vmatpush.msra.mxu0 0.0
        %1294 = vmatpush.msra.mxu0 0.0
        %1295 = vmatpush.msra.mxu0 0.0
        %1296 = vmatpush.msra.mxu0 0.0
        %1297 = vmatpush.msra.mxu0 0.0
        %1298 = vmatpush.msra.mxu0 0.0
        %1299 = vmatpush.msra.mxu0 0.0
        %1300 = vmatpush.msra.mxu0 0.0
        %1301 = vmatpush.msra.mxu0 %v1206
        %1302 = vmatpush.msra.mxu0 %v1205
        %1303 = vmatmul.f32.gmra.mxu0 %v1285
        %v1304 = vpop.f32.mrf.mxu0
        %v1305 = vadd.f32 0.0, %v1304
        %1306 = vdwg.mxu0
        %s1307 = scalar_lea.vmem %s6, 16
        %v1308 = vld [vmem:[%s1307] sm:$0xf]
        %v1310 = vsel %vm1208, %v1308, 0
        %1312 = vmatpush.msra.mxu0 0.0
        %1313 = vmatpush.msra.mxu0 0.0
        %1314 = vmatpush.msra.mxu0 0.0
        %1315 = vmatpush.msra.mxu0 0.0
        %1316 = vmatpush.msra.mxu0 0.0
        %1317 = vmatpush.msra.mxu0 0.0
        %1318 = vmatpush.msra.mxu0 0.0
        %1319 = vmatpush.msra.mxu0 0.0
        %1320 = vmatpush.msra.mxu0 0.0
        %1321 = vmatpush.msra.mxu0 0.0
        %1322 = vmatpush.msra.mxu0 0.0
        %1323 = vmatpush.msra.mxu0 0.0
        %1324 = vmatpush.msra.mxu0 0.0
        %1325 = vmatpush.msra.mxu0 0.0
        %1326 = vmatpush.msra.mxu0 %v1206
        %1327 = vmatpush.msra.mxu0 %v1205
        %1328 = vmatmul.f32.gmra.mxu0 %v1310
        %v1329 = vpop.f32.mrf.mxu0
        %v1330 = vadd.f32 0.0, %v1329
        %1331 = vdwg.mxu0
        %s1332 = scalar_lea.vmem %s6, 20
        %v1333 = vld [vmem:[%s1332] sm:$0xf]
        %v1335 = vsel %vm1208, %v1333, 0
        %1337 = vmatpush.msra.mxu0 0.0
        %1338 = vmatpush.msra.mxu0 0.0
        %1339 = vmatpush.msra.mxu0 0.0
        %1340 = vmatpush.msra.mxu0 0.0
        %1341 = vmatpush.msra.mxu0 0.0
        %1342 = vmatpush.msra.mxu0 0.0
        %1343 = vmatpush.msra.mxu0 0.0
        %1344 = vmatpush.msra.mxu0 0.0
        %1345 = vmatpush.msra.mxu0 0.0
        %1346 = vmatpush.msra.mxu0 0.0
        %1347 = vmatpush.msra.mxu0 0.0
        %1348 = vmatpush.msra.mxu0 0.0
        %1349 = vmatpush.msra.mxu0 0.0
        %1350 = vmatpush.msra.mxu0 0.0
        %1351 = vmatpush.msra.mxu0 %v1206
        %1352 = vmatpush.msra.mxu0 %v1205
        %1353 = vmatmul.f32.gmra.mxu0 %v1335
        %v1354 = vpop.f32.mrf.mxu0
        %v1355 = vadd.f32 0.0, %v1354
        %1356 = vdwg.mxu0
        %s1357 = scalar_lea.vmem %s6, 24
        %v1358 = vld [vmem:[%s1357] sm:$0xf]
        %v1360 = vsel %vm1208, %v1358, 0
        %1362 = vmatpush.msra.mxu0 0.0
        %1363 = vmatpush.msra.mxu0 0.0
        %1364 = vmatpush.msra.mxu0 0.0
        %1365 = vmatpush.msra.mxu0 0.0
        %1366 = vmatpush.msra.mxu0 0.0
        %1367 = vmatpush.msra.mxu0 0.0
        %1368 = vmatpush.msra.mxu0 0.0
        %1369 = vmatpush.msra.mxu0 0.0
        %1370 = vmatpush.msra.mxu0 0.0
        %1371 = vmatpush.msra.mxu0 0.0
        %1372 = vmatpush.msra.mxu0 0.0
        %1373 = vmatpush.msra.mxu0 0.0
        %1374 = vmatpush.msra.mxu0 0.0
        %1375 = vmatpush.msra.mxu0 0.0
        %1376 = vmatpush.msra.mxu0 %v1206
        %1377 = vmatpush.msra.mxu0 %v1205
        %1378 = vmatmul.f32.gmra.mxu0 %v1360
        %v1379 = vpop.f32.mrf.mxu0
        %v1380 = vadd.f32 0.0, %v1379
        %1381 = vdwg.mxu0
        %s1382 = scalar_lea.vmem %s6, 28
        %v1383 = vld [vmem:[%s1382] sm:$0xf]
        %v1385 = vsel %vm1208, %v1383, 0
        %1387 = vmatpush.msra.mxu0 0.0
        %1388 = vmatpush.msra.mxu0 0.0
        %1389 = vmatpush.msra.mxu0 0.0
        %1390 = vmatpush.msra.mxu0 0.0
        %1391 = vmatpush.msra.mxu0 0.0
        %1392 = vmatpush.msra.mxu0 0.0
        %1393 = vmatpush.msra.mxu0 0.0
        %1394 = vmatpush.msra.mxu0 0.0
        %1395 = vmatpush.msra.mxu0 0.0
        %1396 = vmatpush.msra.mxu0 0.0
        %1397 = vmatpush.msra.mxu0 0.0
        %1398 = vmatpush.msra.mxu0 0.0
        %1399 = vmatpush.msra.mxu0 0.0
        %1400 = vmatpush.msra.mxu0 0.0
        %1401 = vmatpush.msra.mxu0 %v1206
        %1402 = vmatpush.msra.mxu0 %v1205
        %1403 = vmatmul.f32.gmra.mxu0 %v1385
        %v1404 = vpop.f32.mrf.mxu0
        %v1405 = vadd.f32 0.0, %v1404
        %1406 = vdwg.mxu0
        %s1407 = scalar_lea.vmem %s6, 32
        %v1408 = vld [vmem:[%s1407] sm:$0xf]
        %v1410 = vsel %vm1208, %v1408, 0
        %1412 = vmatpush.msra.mxu0 0.0
        %1413 = vmatpush.msra.mxu0 0.0
        %1414 = vmatpush.msra.mxu0 0.0
        %1415 = vmatpush.msra.mxu0 0.0
        %1416 = vmatpush.msra.mxu0 0.0
        %1417 = vmatpush.msra.mxu0 0.0
        %1418 = vmatpush.msra.mxu0 0.0
        %1419 = vmatpush.msra.mxu0 0.0
        %1420 = vmatpush.msra.mxu0 0.0
        %1421 = vmatpush.msra.mxu0 0.0
        %1422 = vmatpush.msra.mxu0 0.0
        %1423 = vmatpush.msra.mxu0 0.0
        %1424 = vmatpush.msra.mxu0 0.0
        %1425 = vmatpush.msra.mxu0 0.0
        %1426 = vmatpush.msra.mxu0 %v1206
        %1427 = vmatpush.msra.mxu0 %v1205
        %1428 = vmatmul.f32.gmra.mxu0 %v1410
        %v1429 = vpop.f32.mrf.mxu0
        %v1430 = vadd.f32 0.0, %v1429
        %1431 = vdwg.mxu0
        %v1432 = vld [vmem:[%s7] sm:$0xff]
        %v1433 = vld [vmem:[%s7 + $0x8] sm:$0xff]
        %v1434 = vld [vmem:[%s7 + $0x10] sm:$0xff]
        %v1435 = vld [vmem:[%s7 + $0x18] sm:$0xff]
        %v1436 = vld [vmem:[%s7 + $0x20] sm:$0xff]
        %v1437 = vld [vmem:[%s7 + $0x28] sm:$0xff]
        %v1438 = vld [vmem:[%s7 + $0x30] sm:$0xff]
        %v1439 = vld [vmem:[%s7 + $0x38] sm:$0xff]
        %v1440 = vld [vmem:[%s7 + $0x40] sm:$0xff]
        %v1441 = vld [vmem:[%s7 + $0x48] sm:$0xff]
        %v1442 = vld [vmem:[%s7 + $0x50] sm:$0xff]
        %v1443 = vld [vmem:[%s7 + $0x58] sm:$0xff]
        %v1444 = vld [vmem:[%s7 + $0x60] sm:$0xff]
        %v1445 = vld [vmem:[%s7 + $0x68] sm:$0xff]
        %v1446 = vld [vmem:[%s7 + $0x70] sm:$0xff]
        %v1447 = vld [vmem:[%s7 + $0x78] sm:$0xff]
        %v1448 = vld [vmem:[%s7 + $0x80] sm:$0xff]
        %v1449 = vld [vmem:[%s7 + $0x88] sm:$0xff]
        %v1450 = vld [vmem:[%s7 + $0x90] sm:$0xff]
        %v1451 = vld [vmem:[%s7 + $0x98] sm:$0xff]
        %v1452 = vld [vmem:[%s7 + $0xa0] sm:$0xff]
        %v1453 = vld [vmem:[%s7 + $0xa8] sm:$0xff]
        %v1454 = vld [vmem:[%s7 + $0xb0] sm:$0xff]
        %v1455 = vld [vmem:[%s7 + $0xb8] sm:$0xff]
        %v1456 = vld [vmem:[%s7 + $0xc0] sm:$0xff]
        %v1457 = vld [vmem:[%s7 + $0xc8] sm:$0xff]
        %v1458 = vld [vmem:[%s7 + $0xd0] sm:$0xff]
        %v1459 = vld [vmem:[%s7 + $0xd8] sm:$0xff]
        %v1460 = vld [vmem:[%s7 + $0xe0] sm:$0xff]
        %v1461 = vld [vmem:[%s7 + $0xe8] sm:$0xff]
        %v1462 = vld [vmem:[%s7 + $0xf0] sm:$0xff]
        %v1463 = vld [vmem:[%s7 + $0xf8] sm:$0xff]
        %v1464 = vld [vmem:[%s7 + $0x100] sm:$0xff]
        %v1465 = vld [vmem:[%s7 + $0x108] sm:$0xff]
        %v1466 = vld [vmem:[%s7 + $0x110] sm:$0xff]
        %v1467 = vld [vmem:[%s7 + $0x118] sm:$0xff]
        %v1468 = vld [vmem:[%s7 + $0x120] sm:$0xff]
        %v1469 = vld [vmem:[%s7 + $0x128] sm:$0xff]
        %v1470 = vld [vmem:[%s7 + $0x130] sm:$0xff]
        %v1471 = vld [vmem:[%s7 + $0x138] sm:$0xff]
        %v1472 = vld [vmem:[%s7 + $0x140] sm:$0xff]
        %v1473 = vld [vmem:[%s7 + $0x148] sm:$0xff]
        %v1474 = vld [vmem:[%s7 + $0x150] sm:$0xff]
        %v1475 = vld [vmem:[%s7 + $0x158] sm:$0xff]
        %v1476 = vld [vmem:[%s7 + $0x160] sm:$0xff]
        %v1477 = vld [vmem:[%s7 + $0x168] sm:$0xff]
        %v1478 = vld [vmem:[%s7 + $0x170] sm:$0xff]
        %v1479 = vld [vmem:[%s7 + $0x178] sm:$0xff]
        %v1480 = vld [vmem:[%s7 + $0x180] sm:$0xff]
        %v1481 = vld [vmem:[%s7 + $0x188] sm:$0xff]
        %v1482 = vld [vmem:[%s7 + $0x190] sm:$0xff]
        %v1483 = vld [vmem:[%s7 + $0x198] sm:$0xff]
        %v1484 = vld [vmem:[%s7 + $0x1a0] sm:$0xff]
        %v1485 = vld [vmem:[%s7 + $0x1a8] sm:$0xff]
        %v1486 = vld [vmem:[%s7 + $0x1b0] sm:$0xff]
        %v1487 = vld [vmem:[%s7 + $0x1b8] sm:$0xff]
        %v1488 = vld [vmem:[%s7 + $0x1c0] sm:$0xff]
        %v1489 = vld [vmem:[%s7 + $0x1c8] sm:$0xff]
        %v1490 = vld [vmem:[%s7 + $0x1d0] sm:$0xff]
        %v1491 = vld [vmem:[%s7 + $0x1d8] sm:$0xff]
        %v1492 = vld [vmem:[%s7 + $0x1e0] sm:$0xff]
        %v1493 = vld [vmem:[%s7 + $0x1e8] sm:$0xff]
        %v1494 = vld [vmem:[%s7 + $0x1f0] sm:$0xff]
        %v1495 = vld [vmem:[%s7 + $0x1f8] sm:$0xff]
        %v1496 = vld [vmem:[%s7 + $0x200] sm:$0xff]
        %v1497 = vld [vmem:[%s7 + $0x208] sm:$0xff]
        %v1498 = vld [vmem:[%s7 + $0x210] sm:$0xff]
        %v1499 = vld [vmem:[%s7 + $0x218] sm:$0xff]
        %v1500 = vld [vmem:[%s7 + $0x220] sm:$0xff]
        %v1501 = vld [vmem:[%s7 + $0x228] sm:$0xff]
        %v1502 = vld [vmem:[%s7 + $0x230] sm:$0xff]
        %v1503 = vld [vmem:[%s7 + $0x238] sm:$0xff]
        %v1504 = vld [vmem:[%s7 + $0x240] sm:$0xff]
        %v1505 = vld [vmem:[%s7 + $0x248] sm:$0xff]
        %v1506 = vld [vmem:[%s7 + $0x250] sm:$0xff]
        %v1507 = vld [vmem:[%s7 + $0x258] sm:$0xff]
        %v1508 = vld [vmem:[%s7 + $0x260] sm:$0xff]
        %v1509 = vld [vmem:[%s7 + $0x268] sm:$0xff]
        %v1510 = vld [vmem:[%s7 + $0x270] sm:$0xff]
        %v1511 = vld [vmem:[%s7 + $0x278] sm:$0xff]
        %v1512 = vld [vmem:[%s7 + $0x280] sm:$0xff]
        %v1513 = vld [vmem:[%s7 + $0x288] sm:$0xff]
        %v1514 = vld [vmem:[%s7 + $0x290] sm:$0xff]
        %v1515 = vld [vmem:[%s7 + $0x298] sm:$0xff]
        %v1516 = vld [vmem:[%s7 + $0x2a0] sm:$0xff]
        %v1517 = vld [vmem:[%s7 + $0x2a8] sm:$0xff]
        %v1518 = vld [vmem:[%s7 + $0x2b0] sm:$0xff]
        %v1519 = vld [vmem:[%s7 + $0x2b8] sm:$0xff]
        %v1520 = vld [vmem:[%s7 + $0x2c0] sm:$0xff]
        %v1521 = vld [vmem:[%s7 + $0x2c8] sm:$0xff]
        %v1522 = vld [vmem:[%s7 + $0x2d0] sm:$0xff]
        %v1523 = vld [vmem:[%s7 + $0x2d8] sm:$0xff]
        %v1524 = vld [vmem:[%s7 + $0x2e0] sm:$0xff]
        %v1525 = vld [vmem:[%s7 + $0x2e8] sm:$0xff]
        %v1526 = vld [vmem:[%s7 + $0x2f0] sm:$0xff]
        %v1527 = vld [vmem:[%s7 + $0x2f8] sm:$0xff]
        %v1528 = vld [vmem:[%s7 + $0x300] sm:$0xff]
        %v1529 = vld [vmem:[%s7 + $0x308] sm:$0xff]
        %v1530 = vld [vmem:[%s7 + $0x310] sm:$0xff]
        %v1531 = vld [vmem:[%s7 + $0x318] sm:$0xff]
        %v1532 = vld [vmem:[%s7 + $0x320] sm:$0xff]
        %v1533 = vld [vmem:[%s7 + $0x328] sm:$0xff]
        %v1534 = vld [vmem:[%s7 + $0x330] sm:$0xff]
        %v1535 = vld [vmem:[%s7 + $0x338] sm:$0xff]
        %v1536 = vld [vmem:[%s7 + $0x340] sm:$0xff]
        %v1537 = vld [vmem:[%s7 + $0x348] sm:$0xff]
        %v1538 = vld [vmem:[%s7 + $0x350] sm:$0xff]
        %v1539 = vld [vmem:[%s7 + $0x358] sm:$0xff]
        %v1540 = vld [vmem:[%s7 + $0x360] sm:$0xff]
        %v1541 = vld [vmem:[%s7 + $0x368] sm:$0xff]
        %v1542 = vld [vmem:[%s7 + $0x370] sm:$0xff]
        %v1543 = vld [vmem:[%s7 + $0x378] sm:$0xff]
        %v1544 = vld [vmem:[%s7 + $0x380] sm:$0xff]
        %v1545 = vld [vmem:[%s7 + $0x388] sm:$0xff]
        %v1546 = vld [vmem:[%s7 + $0x390] sm:$0xff]
        %v1547 = vld [vmem:[%s7 + $0x398] sm:$0xff]
        %v1548 = vld [vmem:[%s7 + $0x3a0] sm:$0xff]
        %v1549 = vld [vmem:[%s7 + $0x3a8] sm:$0xff]
        %v1550 = vld [vmem:[%s7 + $0x3b0] sm:$0xff]
        %v1551 = vld [vmem:[%s7 + $0x3b8] sm:$0xff]
        %v1552 = vld [vmem:[%s7 + $0x3c0] sm:$0xff]
        %v1553 = vld [vmem:[%s7 + $0x3c8] sm:$0xff]
        %v1554 = vld [vmem:[%s7 + $0x3d0] sm:$0xff]
        %v1555 = vld [vmem:[%s7 + $0x3d8] sm:$0xff]
        %v1556 = vld [vmem:[%s7 + $0x3e0] sm:$0xff]
        %v1557 = vld [vmem:[%s7 + $0x3e8] sm:$0xff]
        %v1558 = vld [vmem:[%s7 + $0x3f0] sm:$0xff]
        %v1559 = vld [vmem:[%s7 + $0x3f8] sm:$0xff]
        %v1560 = vld [vmem:[%s7 + $0x400] sm:$0xff]
        %v1561 = vld [vmem:[%s7 + $0x408] sm:$0xff]
        %v1562 = vld [vmem:[%s7 + $0x410] sm:$0xff]
        %v1563 = vld [vmem:[%s7 + $0x418] sm:$0xff]
        %v1564 = vld [vmem:[%s7 + $0x420] sm:$0xff]
        %v1565 = vld [vmem:[%s7 + $0x428] sm:$0xff]
        %v1566 = vld [vmem:[%s7 + $0x430] sm:$0xff]
        %v1567 = vld [vmem:[%s7 + $0x438] sm:$0xff]
        %v1568 = vld [vmem:[%s7 + $0x440] sm:$0xff]
        %v1569 = vld [vmem:[%s7 + $0x448] sm:$0xff]
        %v1570 = vld [vmem:[%s7 + $0x450] sm:$0xff]
        %v1571 = vld [vmem:[%s7 + $0x458] sm:$0xff]
        %v1572 = vld [vmem:[%s7 + $0x460] sm:$0xff]
        %v1573 = vld [vmem:[%s7 + $0x468] sm:$0xff]
        %v1574 = vld [vmem:[%s7 + $0x470] sm:$0xff]
        %v1575 = vld [vmem:[%s7 + $0x478] sm:$0xff]
        %v1576 = vld [vmem:[%s8] sm:$0x1]
        %v1578 = vperm.slane %v1576, 0
        %1580 = vmatpush.msra.mxu0 %v1447
        %1581 = vmatpush.msra.mxu0 %v1446
        %1582 = vmatpush.msra.mxu0 %v1445
        %1583 = vmatpush.msra.mxu0 %v1444
        %1584 = vmatpush.msra.mxu0 %v1443
        %1585 = vmatpush.msra.mxu0 %v1442
        %1586 = vmatpush.msra.mxu0 %v1441
        %1587 = vmatpush.msra.mxu0 %v1440
        %1588 = vmatpush.msra.mxu0 %v1439
        %1589 = vmatpush.msra.mxu0 %v1438
        %1590 = vmatpush.msra.mxu0 %v1437
        %1591 = vmatpush.msra.mxu0 %v1436
        %1592 = vmatpush.msra.mxu0 %v1435
        %1593 = vmatpush.msra.mxu0 %v1434
        %1594 = vmatpush.msra.mxu0 %v1433
        %1595 = vmatpush.msra.mxu0 %v1432
        %1596 = vmatmul.f32.gmra.mxu0 %v1230
        %v1597 = vpop.f32.mrf.mxu0
        %v1598 = vadd.f32 %v1578, %v1597
        %1599 = vdwg.mxu0
        %1600 = vmatpush.msra.mxu0 %v1463
        %1601 = vmatpush.msra.mxu0 %v1462
        %1602 = vmatpush.msra.mxu0 %v1461
        %1603 = vmatpush.msra.mxu0 %v1460
        %1604 = vmatpush.msra.mxu0 %v1459
        %1605 = vmatpush.msra.mxu0 %v1458
        %1606 = vmatpush.msra.mxu0 %v1457
        %1607 = vmatpush.msra.mxu0 %v1456
        %1608 = vmatpush.msra.mxu0 %v1455
        %1609 = vmatpush.msra.mxu0 %v1454
        %1610 = vmatpush.msra.mxu0 %v1453
        %1611 = vmatpush.msra.mxu0 %v1452
        %1612 = vmatpush.msra.mxu0 %v1451
        %1613 = vmatpush.msra.mxu0 %v1450
        %1614 = vmatpush.msra.mxu0 %v1449
        %1615 = vmatpush.msra.mxu0 %v1448
        %1616 = vmatmul.f32.gmra.mxu0 %v1255
        %v1617 = vpop.f32.mrf.mxu0
        %v1618 = vadd.f32 %v1598, %v1617
        %1619 = vdwg.mxu0
        %1620 = vmatpush.msra.mxu0 %v1479
        %1621 = vmatpush.msra.mxu0 %v1478
        %1622 = vmatpush.msra.mxu0 %v1477
        %1623 = vmatpush.msra.mxu0 %v1476
        %1624 = vmatpush.msra.mxu0 %v1475
        %1625 = vmatpush.msra.mxu0 %v1474
        %1626 = vmatpush.msra.mxu0 %v1473
        %1627 = vmatpush.msra.mxu0 %v1472
        %1628 = vmatpush.msra.mxu0 %v1471
        %1629 = vmatpush.msra.mxu0 %v1470
        %1630 = vmatpush.msra.mxu0 %v1469
        %1631 = vmatpush.msra.mxu0 %v1468
        %1632 = vmatpush.msra.mxu0 %v1467
        %1633 = vmatpush.msra.mxu0 %v1466
        %1634 = vmatpush.msra.mxu0 %v1465
        %1635 = vmatpush.msra.mxu0 %v1464
        %1636 = vmatmul.f32.gmra.mxu0 %v1280
        %v1637 = vpop.f32.mrf.mxu0
        %v1638 = vadd.f32 %v1618, %v1637
        %1639 = vdwg.mxu0
        %1640 = vmatpush.msra.mxu0 %v1495
        %1641 = vmatpush.msra.mxu0 %v1494
        %1642 = vmatpush.msra.mxu0 %v1493
        %1643 = vmatpush.msra.mxu0 %v1492
        %1644 = vmatpush.msra.mxu0 %v1491
        %1645 = vmatpush.msra.mxu0 %v1490
        %1646 = vmatpush.msra.mxu0 %v1489
        %1647 = vmatpush.msra.mxu0 %v1488
        %1648 = vmatpush.msra.mxu0 %v1487
        %1649 = vmatpush.msra.mxu0 %v1486
        %1650 = vmatpush.msra.mxu0 %v1485
        %1651 = vmatpush.msra.mxu0 %v1484
        %1652 = vmatpush.msra.mxu0 %v1483
        %1653 = vmatpush.msra.mxu0 %v1482
        %1654 = vmatpush.msra.mxu0 %v1481
        %1655 = vmatpush.msra.mxu0 %v1480
        %1656 = vmatmul.f32.gmra.mxu0 %v1305
        %v1657 = vpop.f32.mrf.mxu0
        %v1658 = vadd.f32 %v1638, %v1657
        %1659 = vdwg.mxu0
        %1660 = vmatpush.msra.mxu0 %v1511
        %1661 = vmatpush.msra.mxu0 %v1510
        %1662 = vmatpush.msra.mxu0 %v1509
        %1663 = vmatpush.msra.mxu0 %v1508
        %1664 = vmatpush.msra.mxu0 %v1507
        %1665 = vmatpush.msra.mxu0 %v1506
        %1666 = vmatpush.msra.mxu0 %v1505
        %1667 = vmatpush.msra.mxu0 %v1504
        %1668 = vmatpush.msra.mxu0 %v1503
        %1669 = vmatpush.msra.mxu0 %v1502
        %1670 = vmatpush.msra.mxu0 %v1501
        %1671 = vmatpush.msra.mxu0 %v1500
        %1672 = vmatpush.msra.mxu0 %v1499
        %1673 = vmatpush.msra.mxu0 %v1498
        %1674 = vmatpush.msra.mxu0 %v1497
        %1675 = vmatpush.msra.mxu0 %v1496
        %1676 = vmatmul.f32.gmra.mxu0 %v1330
        %v1677 = vpop.f32.mrf.mxu0
        %v1678 = vadd.f32 %v1658, %v1677
        %1679 = vdwg.mxu0
        %1680 = vmatpush.msra.mxu0 %v1527
        %1681 = vmatpush.msra.mxu0 %v1526
        %1682 = vmatpush.msra.mxu0 %v1525
        %1683 = vmatpush.msra.mxu0 %v1524
        %1684 = vmatpush.msra.mxu0 %v1523
        %1685 = vmatpush.msra.mxu0 %v1522
        %1686 = vmatpush.msra.mxu0 %v1521
        %1687 = vmatpush.msra.mxu0 %v1520
        %1688 = vmatpush.msra.mxu0 %v1519
        %1689 = vmatpush.msra.mxu0 %v1518
        %1690 = vmatpush.msra.mxu0 %v1517
        %1691 = vmatpush.msra.mxu0 %v1516
        %1692 = vmatpush.msra.mxu0 %v1515
        %1693 = vmatpush.msra.mxu0 %v1514
        %1694 = vmatpush.msra.mxu0 %v1513
        %1695 = vmatpush.msra.mxu0 %v1512
        %1696 = vmatmul.f32.gmra.mxu0 %v1355
        %v1697 = vpop.f32.mrf.mxu0
        %v1698 = vadd.f32 %v1678, %v1697
        %1699 = vdwg.mxu0
        %1700 = vmatpush.msra.mxu0 %v1543
        %1701 = vmatpush.msra.mxu0 %v1542
        %1702 = vmatpush.msra.mxu0 %v1541
        %1703 = vmatpush.msra.mxu0 %v1540
        %1704 = vmatpush.msra.mxu0 %v1539
        %1705 = vmatpush.msra.mxu0 %v1538
        %1706 = vmatpush.msra.mxu0 %v1537
        %1707 = vmatpush.msra.mxu0 %v1536
        %1708 = vmatpush.msra.mxu0 %v1535
        %1709 = vmatpush.msra.mxu0 %v1534
        %1710 = vmatpush.msra.mxu0 %v1533
        %1711 = vmatpush.msra.mxu0 %v1532
        %1712 = vmatpush.msra.mxu0 %v1531
        %1713 = vmatpush.msra.mxu0 %v1530
        %1714 = vmatpush.msra.mxu0 %v1529
        %1715 = vmatpush.msra.mxu0 %v1528
        %1716 = vmatmul.f32.gmra.mxu0 %v1380
        %v1717 = vpop.f32.mrf.mxu0
        %v1718 = vadd.f32 %v1698, %v1717
        %1719 = vdwg.mxu0
        %1720 = vmatpush.msra.mxu0 %v1559
        %1721 = vmatpush.msra.mxu0 %v1558
        %1722 = vmatpush.msra.mxu0 %v1557
        %1723 = vmatpush.msra.mxu0 %v1556
        %1724 = vmatpush.msra.mxu0 %v1555
        %1725 = vmatpush.msra.mxu0 %v1554
        %1726 = vmatpush.msra.mxu0 %v1553
        %1727 = vmatpush.msra.mxu0 %v1552
        %1728 = vmatpush.msra.mxu0 %v1551
        %1729 = vmatpush.msra.mxu0 %v1550
        %1730 = vmatpush.msra.mxu0 %v1549
        %1731 = vmatpush.msra.mxu0 %v1548
        %1732 = vmatpush.msra.mxu0 %v1547
        %1733 = vmatpush.msra.mxu0 %v1546
        %1734 = vmatpush.msra.mxu0 %v1545
        %1735 = vmatpush.msra.mxu0 %v1544
        %1736 = vmatmul.f32.gmra.mxu0 %v1405
        %v1737 = vpop.f32.mrf.mxu0
        %v1738 = vadd.f32 %v1718, %v1737
        %1739 = vdwg.mxu0
        %1740 = vmatpush.msra.mxu0 %v1575
        %1741 = vmatpush.msra.mxu0 %v1574
        %1742 = vmatpush.msra.mxu0 %v1573
        %1743 = vmatpush.msra.mxu0 %v1572
        %1744 = vmatpush.msra.mxu0 %v1571
        %1745 = vmatpush.msra.mxu0 %v1570
        %1746 = vmatpush.msra.mxu0 %v1569
        %1747 = vmatpush.msra.mxu0 %v1568
        %1748 = vmatpush.msra.mxu0 %v1567
        %1749 = vmatpush.msra.mxu0 %v1566
        %1750 = vmatpush.msra.mxu0 %v1565
        %1751 = vmatpush.msra.mxu0 %v1564
        %1752 = vmatpush.msra.mxu0 %v1563
        %1753 = vmatpush.msra.mxu0 %v1562
        %1754 = vmatpush.msra.mxu0 %v1561
        %1755 = vmatpush.msra.mxu0 %v1560
        %1756 = vmatmul.f32.gmra.mxu0 %v1430
        %v1757 = vpop.f32.mrf.mxu0
        %v1758 = vadd.f32 %v1738, %v1757
        %1759 = vdwg.mxu0
        %vm1760 = vcmp.ge.f32.partialorder %v1758, 0.0
        %v1761 = vmul.f32 %v1758, 0.01
        %v1762 = vsel %vm1760, %v1758, %v1761
        %s1763 = scalar_lea.vmem %s9, 4
        %v1764 = vld [vmem:[%s1763] sm:$0x1]
        %vm1765 = vcmask 31744
        %v1767 = vsel %vm1765, %v1764, 0
        %vm1769 = vcmask 1043456
        %v1771 = vsel %vm1769, %v1762, 0
        %1773 = vmatpush.msra.mxu0 0.0
        %1774 = vmatpush.msra.mxu0 0.0
        %1775 = vmatpush.msra.mxu0 0.0
        %1776 = vmatpush.msra.mxu0 0.0
        %1777 = vmatpush.msra.mxu0 0.0
        %1778 = vmatpush.msra.mxu0 0.0
        %1779 = vmatpush.msra.mxu0 0.0
        %1780 = vmatpush.msra.mxu0 0.0
        %1781 = vmatpush.msra.mxu0 0.0
        %1782 = vmatpush.msra.mxu0 0.0
        %1783 = vmatpush.msra.mxu0 0.0
        %1784 = vmatpush.msra.mxu0 0.0
        %1785 = vmatpush.msra.mxu0 0.0
        %1786 = vmatpush.msra.mxu0 0.0
        %1787 = vmatpush.msra.mxu0 0.0
        %1788 = vmatpush.msra.mxu0 %v1771
        %1789 = vmatmul.f32.gmra.mxu0 %v1767
        %v1790 = vpop.f32.mrf.mxu0
        %v1791 = vadd.f32 0.0, %v1790
        %1792 = vdwg.mxu0
        %s1793 = scalar_lea.vmem %s9, 5
        %v1794 = vld [vmem:[%s1793] sm:$0x1]
        %v1796 = vsel %vm1765, %v1794, 0
        %1798 = vmatpush.msra.mxu0 0.0
        %1799 = vmatpush.msra.mxu0 0.0
        %1800 = vmatpush.msra.mxu0 0.0
        %1801 = vmatpush.msra.mxu0 0.0
        %1802 = vmatpush.msra.mxu0 0.0
        %1803 = vmatpush.msra.mxu0 0.0
        %1804 = vmatpush.msra.mxu0 0.0
        %1805 = vmatpush.msra.mxu0 0.0
        %1806 = vmatpush.msra.mxu0 0.0
        %1807 = vmatpush.msra.mxu0 0.0
        %1808 = vmatpush.msra.mxu0 0.0
        %1809 = vmatpush.msra.mxu0 0.0
        %1810 = vmatpush.msra.mxu0 0.0
        %1811 = vmatpush.msra.mxu0 0.0
        %1812 = vmatpush.msra.mxu0 0.0
        %1813 = vmatpush.msra.mxu0 %v1771
        %1814 = vmatmul.f32.gmra.mxu0 %v1796
        %v1815 = vpop.f32.mrf.mxu0
        %v1816 = vadd.f32 0.0, %v1815
        %1817 = vdwg.mxu0
        %s1818 = scalar_lea.vmem %s9, 7
        %v1819 = vld [vmem:[%s1818] sm:$0x1]
        %v1821 = vsel %vm1765, %v1819, 0
        %1823 = vmatpush.msra.mxu0 0.0
        %1824 = vmatpush.msra.mxu0 0.0
        %1825 = vmatpush.msra.mxu0 0.0
        %1826 = vmatpush.msra.mxu0 0.0
        %1827 = vmatpush.msra.mxu0 0.0
        %1828 = vmatpush.msra.mxu0 0.0
        %1829 = vmatpush.msra.mxu0 0.0
        %1830 = vmatpush.msra.mxu0 0.0
        %1831 = vmatpush.msra.mxu0 0.0
        %1832 = vmatpush.msra.mxu0 0.0
        %1833 = vmatpush.msra.mxu0 0.0
        %1834 = vmatpush.msra.mxu0 0.0
        %1835 = vmatpush.msra.mxu0 0.0
        %1836 = vmatpush.msra.mxu0 0.0
        %1837 = vmatpush.msra.mxu0 0.0
        %1838 = vmatpush.msra.mxu0 %v1771
        %1839 = vmatmul.f32.gmra.mxu0 %v1821
        %v1840 = vpop.f32.mrf.mxu0
        %v1841 = vadd.f32 0.0, %v1840
        %1842 = vdwg.mxu0
        %s1843 = scalar_lea.vmem %s9, 8
        %v1844 = vld [vmem:[%s1843] sm:$0x1]
        %v1846 = vsel %vm1765, %v1844, 0
        %1848 = vmatpush.msra.mxu0 0.0
        %1849 = vmatpush.msra.mxu0 0.0
        %1850 = vmatpush.msra.mxu0 0.0
        %1851 = vmatpush.msra.mxu0 0.0
        %1852 = vmatpush.msra.mxu0 0.0
        %1853 = vmatpush.msra.mxu0 0.0
        %1854 = vmatpush.msra.mxu0 0.0
        %1855 = vmatpush.msra.mxu0 0.0
        %1856 = vmatpush.msra.mxu0 0.0
        %1857 = vmatpush.msra.mxu0 0.0
        %1858 = vmatpush.msra.mxu0 0.0
        %1859 = vmatpush.msra.mxu0 0.0
        %1860 = vmatpush.msra.mxu0 0.0
        %1861 = vmatpush.msra.mxu0 0.0
        %1862 = vmatpush.msra.mxu0 0.0
        %1863 = vmatpush.msra.mxu0 %v1771
        %1864 = vmatmul.f32.gmra.mxu0 %v1846
        %v1865 = vpop.f32.mrf.mxu0
        %v1866 = vadd.f32 0.0, %v1865
        %1867 = vdwg.mxu0
        %v1868 = vld [vmem:[%s10] sm:$0xff]
        %v1869 = vld [vmem:[%s10 + $0x8] sm:$0xff]
        %v1870 = vld [vmem:[%s10 + $0x10] sm:$0xff]
        %v1871 = vld [vmem:[%s10 + $0x18] sm:$0xff]
        %v1872 = vld [vmem:[%s10 + $0x20] sm:$0xff]
        %v1873 = vld [vmem:[%s10 + $0x28] sm:$0xff]
        %v1874 = vld [vmem:[%s10 + $0x30] sm:$0xff]
        %v1875 = vld [vmem:[%s10 + $0x38] sm:$0xff]
        %v1876 = vld [vmem:[%s10 + $0x40] sm:$0xff]
        %v1877 = vld [vmem:[%s10 + $0x48] sm:$0xff]
        %v1878 = vld [vmem:[%s10 + $0x50] sm:$0xff]
        %v1879 = vld [vmem:[%s10 + $0x58] sm:$0xff]
        %v1880 = vld [vmem:[%s10 + $0x60] sm:$0xff]
        %v1881 = vld [vmem:[%s10 + $0x68] sm:$0xff]
        %v1882 = vld [vmem:[%s10 + $0x70] sm:$0xff]
        %v1883 = vld [vmem:[%s10 + $0x78] sm:$0xff]
        %v1884 = vld [vmem:[%s10 + $0x80] sm:$0xff]
        %v1885 = vld [vmem:[%s10 + $0x88] sm:$0xff]
        %v1886 = vld [vmem:[%s10 + $0x90] sm:$0xff]
        %v1887 = vld [vmem:[%s10 + $0x98] sm:$0xff]
        %v1888 = vld [vmem:[%s10 + $0xa0] sm:$0xff]
        %v1889 = vld [vmem:[%s10 + $0xa8] sm:$0xff]
        %v1890 = vld [vmem:[%s10 + $0xb0] sm:$0xff]
        %v1891 = vld [vmem:[%s10 + $0xb8] sm:$0xff]
        %v1892 = vld [vmem:[%s10 + $0xc0] sm:$0xff]
        %v1893 = vld [vmem:[%s10 + $0xc8] sm:$0xff]
        %v1894 = vld [vmem:[%s10 + $0xd0] sm:$0xff]
        %v1895 = vld [vmem:[%s10 + $0xd8] sm:$0xff]
        %v1896 = vld [vmem:[%s10 + $0xe0] sm:$0xff]
        %v1897 = vld [vmem:[%s10 + $0xe8] sm:$0xff]
        %v1898 = vld [vmem:[%s10 + $0xf0] sm:$0xff]
        %v1899 = vld [vmem:[%s10 + $0xf8] sm:$0xff]
        %v1900 = vld [vmem:[%s10 + $0x100] sm:$0xff]
        %v1901 = vld [vmem:[%s10 + $0x108] sm:$0xff]
        %v1902 = vld [vmem:[%s10 + $0x110] sm:$0xff]
        %v1903 = vld [vmem:[%s10 + $0x118] sm:$0xff]
        %v1904 = vld [vmem:[%s10 + $0x120] sm:$0xff]
        %v1905 = vld [vmem:[%s10 + $0x128] sm:$0xff]
        %v1906 = vld [vmem:[%s10 + $0x130] sm:$0xff]
        %v1907 = vld [vmem:[%s10 + $0x138] sm:$0xff]
        %v1908 = vld [vmem:[%s10 + $0x140] sm:$0xff]
        %v1909 = vld [vmem:[%s10 + $0x148] sm:$0xff]
        %v1910 = vld [vmem:[%s10 + $0x150] sm:$0xff]
        %v1911 = vld [vmem:[%s10 + $0x158] sm:$0xff]
        %v1912 = vld [vmem:[%s10 + $0x160] sm:$0xff]
        %v1913 = vld [vmem:[%s10 + $0x168] sm:$0xff]
        %v1914 = vld [vmem:[%s10 + $0x170] sm:$0xff]
        %v1915 = vld [vmem:[%s10 + $0x178] sm:$0xff]
        %v1916 = vld [vmem:[%s10 + $0x180] sm:$0xff]
        %v1917 = vld [vmem:[%s10 + $0x188] sm:$0xff]
        %v1918 = vld [vmem:[%s10 + $0x190] sm:$0xff]
        %v1919 = vld [vmem:[%s10 + $0x198] sm:$0xff]
        %v1920 = vld [vmem:[%s10 + $0x1a0] sm:$0xff]
        %v1921 = vld [vmem:[%s10 + $0x1a8] sm:$0xff]
        %v1922 = vld [vmem:[%s10 + $0x1b0] sm:$0xff]
        %v1923 = vld [vmem:[%s10 + $0x1b8] sm:$0xff]
        %v1924 = vld [vmem:[%s10 + $0x1c0] sm:$0xff]
        %v1925 = vld [vmem:[%s10 + $0x1c8] sm:$0xff]
        %v1926 = vld [vmem:[%s10 + $0x1d0] sm:$0xff]
        %v1927 = vld [vmem:[%s10 + $0x1d8] sm:$0xff]
        %v1928 = vld [vmem:[%s10 + $0x1e0] sm:$0xff]
        %v1929 = vld [vmem:[%s10 + $0x1e8] sm:$0xff]
        %v1930 = vld [vmem:[%s10 + $0x1f0] sm:$0xff]
        %v1931 = vld [vmem:[%s10 + $0x1f8] sm:$0xff]
        %v1932 = vld [vmem:[%s10 + $0x200] sm:$0xff]
        %v1933 = vld [vmem:[%s10 + $0x208] sm:$0xff]
        %v1934 = vld [vmem:[%s10 + $0x210] sm:$0xff]
        %v1935 = vld [vmem:[%s10 + $0x218] sm:$0xff]
        %v1936 = vld [vmem:[%s10 + $0x220] sm:$0xff]
        %v1937 = vld [vmem:[%s10 + $0x228] sm:$0xff]
        %v1938 = vld [vmem:[%s10 + $0x230] sm:$0xff]
        %v1939 = vld [vmem:[%s10 + $0x238] sm:$0xff]
        %v1940 = vld [vmem:[%s10 + $0x240] sm:$0xff]
        %v1941 = vld [vmem:[%s10 + $0x248] sm:$0xff]
        %v1942 = vld [vmem:[%s10 + $0x250] sm:$0xff]
        %v1943 = vld [vmem:[%s10 + $0x258] sm:$0xff]
        %v1944 = vld [vmem:[%s10 + $0x260] sm:$0xff]
        %v1945 = vld [vmem:[%s10 + $0x268] sm:$0xff]
        %v1946 = vld [vmem:[%s10 + $0x270] sm:$0xff]
        %v1947 = vld [vmem:[%s10 + $0x278] sm:$0xff]
        %v1948 = vld [vmem:[%s10 + $0x280] sm:$0xff]
        %v1949 = vld [vmem:[%s10 + $0x288] sm:$0xff]
        %v1950 = vld [vmem:[%s10 + $0x290] sm:$0xff]
        %v1951 = vld [vmem:[%s10 + $0x298] sm:$0xff]
        %v1952 = vld [vmem:[%s10 + $0x2a0] sm:$0xff]
        %v1953 = vld [vmem:[%s10 + $0x2a8] sm:$0xff]
        %v1954 = vld [vmem:[%s10 + $0x2b0] sm:$0xff]
        %v1955 = vld [vmem:[%s10 + $0x2b8] sm:$0xff]
        %v1956 = vld [vmem:[%s10 + $0x2c0] sm:$0xff]
        %v1957 = vld [vmem:[%s10 + $0x2c8] sm:$0xff]
        %v1958 = vld [vmem:[%s10 + $0x2d0] sm:$0xff]
        %v1959 = vld [vmem:[%s10 + $0x2d8] sm:$0xff]
        %v1960 = vld [vmem:[%s10 + $0x2e0] sm:$0xff]
        %v1961 = vld [vmem:[%s10 + $0x2e8] sm:$0xff]
        %v1962 = vld [vmem:[%s10 + $0x2f0] sm:$0xff]
        %v1963 = vld [vmem:[%s10 + $0x2f8] sm:$0xff]
        %v1964 = vld [vmem:[%s10 + $0x300] sm:$0xff]
        %v1965 = vld [vmem:[%s10 + $0x308] sm:$0xff]
        %v1966 = vld [vmem:[%s10 + $0x310] sm:$0xff]
        %v1967 = vld [vmem:[%s10 + $0x318] sm:$0xff]
        %v1968 = vld [vmem:[%s10 + $0x320] sm:$0xff]
        %v1969 = vld [vmem:[%s10 + $0x328] sm:$0xff]
        %v1970 = vld [vmem:[%s10 + $0x330] sm:$0xff]
        %v1971 = vld [vmem:[%s10 + $0x338] sm:$0xff]
        %v1972 = vld [vmem:[%s10 + $0x340] sm:$0xff]
        %v1973 = vld [vmem:[%s10 + $0x348] sm:$0xff]
        %v1974 = vld [vmem:[%s10 + $0x350] sm:$0xff]
        %v1975 = vld [vmem:[%s10 + $0x358] sm:$0xff]
        %v1976 = vld [vmem:[%s10 + $0x360] sm:$0xff]
        %v1977 = vld [vmem:[%s10 + $0x368] sm:$0xff]
        %v1978 = vld [vmem:[%s10 + $0x370] sm:$0xff]
        %v1979 = vld [vmem:[%s10 + $0x378] sm:$0xff]
        %v1980 = vld [vmem:[%s10 + $0x380] sm:$0xff]
        %v1981 = vld [vmem:[%s10 + $0x388] sm:$0xff]
        %v1982 = vld [vmem:[%s10 + $0x390] sm:$0xff]
        %v1983 = vld [vmem:[%s10 + $0x398] sm:$0xff]
        %v1984 = vld [vmem:[%s10 + $0x3a0] sm:$0xff]
        %v1985 = vld [vmem:[%s10 + $0x3a8] sm:$0xff]
        %v1986 = vld [vmem:[%s10 + $0x3b0] sm:$0xff]
        %v1987 = vld [vmem:[%s10 + $0x3b8] sm:$0xff]
        %v1988 = vld [vmem:[%s10 + $0x3c0] sm:$0xff]
        %v1989 = vld [vmem:[%s10 + $0x3c8] sm:$0xff]
        %v1990 = vld [vmem:[%s10 + $0x3d0] sm:$0xff]
        %v1991 = vld [vmem:[%s10 + $0x3d8] sm:$0xff]
        %v1992 = vld [vmem:[%s10 + $0x3e0] sm:$0xff]
        %v1993 = vld [vmem:[%s10 + $0x3e8] sm:$0xff]
        %v1994 = vld [vmem:[%s10 + $0x3f0] sm:$0xff]
        %v1995 = vld [vmem:[%s10 + $0x3f8] sm:$0xff]
        %v1996 = vld [vmem:[%s10 + $0x400] sm:$0xff]
        %v1997 = vld [vmem:[%s10 + $0x408] sm:$0xff]
        %v1998 = vld [vmem:[%s10 + $0x410] sm:$0xff]
        %v1999 = vld [vmem:[%s10 + $0x418] sm:$0xff]
        %v2000 = vld [vmem:[%s10 + $0x420] sm:$0xff]
        %v2001 = vld [vmem:[%s10 + $0x428] sm:$0xff]
        %v2002 = vld [vmem:[%s10 + $0x430] sm:$0xff]
        %v2003 = vld [vmem:[%s10 + $0x438] sm:$0xff]
        %v2004 = vld [vmem:[%s10 + $0x440] sm:$0xff]
        %v2005 = vld [vmem:[%s10 + $0x448] sm:$0xff]
        %v2006 = vld [vmem:[%s10 + $0x450] sm:$0xff]
        %v2007 = vld [vmem:[%s10 + $0x458] sm:$0xff]
        %v2008 = vld [vmem:[%s10 + $0x460] sm:$0xff]
        %v2009 = vld [vmem:[%s10 + $0x468] sm:$0xff]
        %v2010 = vld [vmem:[%s10 + $0x470] sm:$0xff]
        %v2011 = vld [vmem:[%s10 + $0x478] sm:$0xff]
        %v2012 = vld [vmem:[%s11] sm:$0x1]
        %2013 = vmatpush.msra.mxu0 %v1883
        %2014 = vmatpush.msra.mxu0 %v1882
        %2015 = vmatpush.msra.mxu0 %v1881
        %2016 = vmatpush.msra.mxu0 %v1880
        %2017 = vmatpush.msra.mxu0 %v1879
        %2018 = vmatpush.msra.mxu0 %v1878
        %2019 = vmatpush.msra.mxu0 %v1877
        %2020 = vmatpush.msra.mxu0 %v1876
        %2021 = vmatpush.msra.mxu0 %v1875
        %2022 = vmatpush.msra.mxu0 %v1874
        %2023 = vmatpush.msra.mxu0 %v1873
        %2024 = vmatpush.msra.mxu0 %v1872
        %2025 = vmatpush.msra.mxu0 %v1871
        %2026 = vmatpush.msra.mxu0 %v1870
        %2027 = vmatpush.msra.mxu0 %v1869
        %2028 = vmatpush.msra.mxu0 %v1868
        %2029 = vmatmul.f32.gmra.mxu0 0.0
        %v2030 = vpop.f32.mrf.mxu0
        %v2031 = vadd.f32 %v2012, %v2030
        %2032 = vdwg.mxu0
        %2033 = vmatpush.msra.mxu0 %v1899
        %2034 = vmatpush.msra.mxu0 %v1898
        %2035 = vmatpush.msra.mxu0 %v1897
        %2036 = vmatpush.msra.mxu0 %v1896
        %2037 = vmatpush.msra.mxu0 %v1895
        %2038 = vmatpush.msra.mxu0 %v1894
        %2039 = vmatpush.msra.mxu0 %v1893
        %2040 = vmatpush.msra.mxu0 %v1892
        %2041 = vmatpush.msra.mxu0 %v1891
        %2042 = vmatpush.msra.mxu0 %v1890
        %2043 = vmatpush.msra.mxu0 %v1889
        %2044 = vmatpush.msra.mxu0 %v1888
        %2045 = vmatpush.msra.mxu0 %v1887
        %2046 = vmatpush.msra.mxu0 %v1886
        %2047 = vmatpush.msra.mxu0 %v1885
        %2048 = vmatpush.msra.mxu0 %v1884
        %2049 = vmatmul.f32.gmra.mxu0 0.0
        %v2050 = vpop.f32.mrf.mxu0
        %v2051 = vadd.f32 %v2031, %v2050
        %2052 = vdwg.mxu0
        %2053 = vmatpush.msra.mxu0 %v1915
        %2054 = vmatpush.msra.mxu0 %v1914
        %2055 = vmatpush.msra.mxu0 %v1913
        %2056 = vmatpush.msra.mxu0 %v1912
        %2057 = vmatpush.msra.mxu0 %v1911
        %2058 = vmatpush.msra.mxu0 %v1910
        %2059 = vmatpush.msra.mxu0 %v1909
        %2060 = vmatpush.msra.mxu0 %v1908
        %2061 = vmatpush.msra.mxu0 %v1907
        %2062 = vmatpush.msra.mxu0 %v1906
        %2063 = vmatpush.msra.mxu0 %v1905
        %2064 = vmatpush.msra.mxu0 %v1904
        %2065 = vmatpush.msra.mxu0 %v1903
        %2066 = vmatpush.msra.mxu0 %v1902
        %2067 = vmatpush.msra.mxu0 %v1901
        %2068 = vmatpush.msra.mxu0 %v1900
        %2069 = vmatmul.f32.gmra.mxu0 0.0
        %v2070 = vpop.f32.mrf.mxu0
        %v2071 = vadd.f32 %v2051, %v2070
        %2072 = vdwg.mxu0
        %2073 = vmatpush.msra.mxu0 %v1931
        %2074 = vmatpush.msra.mxu0 %v1930
        %2075 = vmatpush.msra.mxu0 %v1929
        %2076 = vmatpush.msra.mxu0 %v1928
        %2077 = vmatpush.msra.mxu0 %v1927
        %2078 = vmatpush.msra.mxu0 %v1926
        %2079 = vmatpush.msra.mxu0 %v1925
        %2080 = vmatpush.msra.mxu0 %v1924
        %2081 = vmatpush.msra.mxu0 %v1923
        %2082 = vmatpush.msra.mxu0 %v1922
        %2083 = vmatpush.msra.mxu0 %v1921
        %2084 = vmatpush.msra.mxu0 %v1920
        %2085 = vmatpush.msra.mxu0 %v1919
        %2086 = vmatpush.msra.mxu0 %v1918
        %2087 = vmatpush.msra.mxu0 %v1917
        %2088 = vmatpush.msra.mxu0 %v1916
        %2089 = vmatmul.f32.gmra.mxu0 0.0
        %v2090 = vpop.f32.mrf.mxu0
        %v2091 = vadd.f32 %v2071, %v2090
        %2092 = vdwg.mxu0
        %2093 = vmatpush.msra.mxu0 %v1947
        %2094 = vmatpush.msra.mxu0 %v1946
        %2095 = vmatpush.msra.mxu0 %v1945
        %2096 = vmatpush.msra.mxu0 %v1944
        %2097 = vmatpush.msra.mxu0 %v1943
        %2098 = vmatpush.msra.mxu0 %v1942
        %2099 = vmatpush.msra.mxu0 %v1941
        %2100 = vmatpush.msra.mxu0 %v1940
        %2101 = vmatpush.msra.mxu0 %v1939
        %2102 = vmatpush.msra.mxu0 %v1938
        %2103 = vmatpush.msra.mxu0 %v1937
        %2104 = vmatpush.msra.mxu0 %v1936
        %2105 = vmatpush.msra.mxu0 %v1935
        %2106 = vmatpush.msra.mxu0 %v1934
        %2107 = vmatpush.msra.mxu0 %v1933
        %2108 = vmatpush.msra.mxu0 %v1932
        %2109 = vmatmul.f32.gmra.mxu0 %v1791
        %v2110 = vpop.f32.mrf.mxu0
        %v2111 = vadd.f32 %v2091, %v2110
        %2112 = vdwg.mxu0
        %2113 = vmatpush.msra.mxu0 %v1963
        %2114 = vmatpush.msra.mxu0 %v1962
        %2115 = vmatpush.msra.mxu0 %v1961
        %2116 = vmatpush.msra.mxu0 %v1960
        %2117 = vmatpush.msra.mxu0 %v1959
        %2118 = vmatpush.msra.mxu0 %v1958
        %2119 = vmatpush.msra.mxu0 %v1957
        %2120 = vmatpush.msra.mxu0 %v1956
        %2121 = vmatpush.msra.mxu0 %v1955
        %2122 = vmatpush.msra.mxu0 %v1954
        %2123 = vmatpush.msra.mxu0 %v1953
        %2124 = vmatpush.msra.mxu0 %v1952
        %2125 = vmatpush.msra.mxu0 %v1951
        %2126 = vmatpush.msra.mxu0 %v1950
        %2127 = vmatpush.msra.mxu0 %v1949
        %2128 = vmatpush.msra.mxu0 %v1948
        %2129 = vmatmul.f32.gmra.mxu0 %v1816
        %v2130 = vpop.f32.mrf.mxu0
        %v2131 = vadd.f32 %v2111, %v2130
        %2132 = vdwg.mxu0
        %2133 = vmatpush.msra.mxu0 %v1979
        %2134 = vmatpush.msra.mxu0 %v1978
        %2135 = vmatpush.msra.mxu0 %v1977
        %2136 = vmatpush.msra.mxu0 %v1976
        %2137 = vmatpush.msra.mxu0 %v1975
        %2138 = vmatpush.msra.mxu0 %v1974
        %2139 = vmatpush.msra.mxu0 %v1973
        %2140 = vmatpush.msra.mxu0 %v1972
        %2141 = vmatpush.msra.mxu0 %v1971
        %2142 = vmatpush.msra.mxu0 %v1970
        %2143 = vmatpush.msra.mxu0 %v1969
        %2144 = vmatpush.msra.mxu0 %v1968
        %2145 = vmatpush.msra.mxu0 %v1967
        %2146 = vmatpush.msra.mxu0 %v1966
        %2147 = vmatpush.msra.mxu0 %v1965
        %2148 = vmatpush.msra.mxu0 %v1964
        %2149 = vmatmul.f32.gmra.mxu0 0.0
        %v2150 = vpop.f32.mrf.mxu0
        %v2151 = vadd.f32 %v2131, %v2150
        %2152 = vdwg.mxu0
        %2153 = vmatpush.msra.mxu0 %v1995
        %2154 = vmatpush.msra.mxu0 %v1994
        %2155 = vmatpush.msra.mxu0 %v1993
        %2156 = vmatpush.msra.mxu0 %v1992
        %2157 = vmatpush.msra.mxu0 %v1991
        %2158 = vmatpush.msra.mxu0 %v1990
        %2159 = vmatpush.msra.mxu0 %v1989
        %2160 = vmatpush.msra.mxu0 %v1988
        %2161 = vmatpush.msra.mxu0 %v1987
        %2162 = vmatpush.msra.mxu0 %v1986
        %2163 = vmatpush.msra.mxu0 %v1985
        %2164 = vmatpush.msra.mxu0 %v1984
        %2165 = vmatpush.msra.mxu0 %v1983
        %2166 = vmatpush.msra.mxu0 %v1982
        %2167 = vmatpush.msra.mxu0 %v1981
        %2168 = vmatpush.msra.mxu0 %v1980
        %2169 = vmatmul.f32.gmra.mxu0 %v1841
        %v2170 = vpop.f32.mrf.mxu0
        %v2171 = vadd.f32 %v2151, %v2170
        %2172 = vdwg.mxu0
        %2173 = vmatpush.msra.mxu0 %v2011
        %2174 = vmatpush.msra.mxu0 %v2010
        %2175 = vmatpush.msra.mxu0 %v2009
        %2176 = vmatpush.msra.mxu0 %v2008
        %2177 = vmatpush.msra.mxu0 %v2007
        %2178 = vmatpush.msra.mxu0 %v2006
        %2179 = vmatpush.msra.mxu0 %v2005
        %2180 = vmatpush.msra.mxu0 %v2004
        %2181 = vmatpush.msra.mxu0 %v2003
        %2182 = vmatpush.msra.mxu0 %v2002
        %2183 = vmatpush.msra.mxu0 %v2001
        %2184 = vmatpush.msra.mxu0 %v2000
        %2185 = vmatpush.msra.mxu0 %v1999
        %2186 = vmatpush.msra.mxu0 %v1998
        %2187 = vmatpush.msra.mxu0 %v1997
        %2188 = vmatpush.msra.mxu0 %v1996
        %2189 = vmatmul.f32.gmra.mxu0 %v1866
        %v2190 = vpop.f32.mrf.mxu0
        %v2191 = vadd.f32 %v2171, %v2190
        %2192 = vdwg.mxu0
        %vm2193 = vcmp.ge.f32.partialorder %v2191, 0.0
        %v2194 = vmul.f32 %v2191, 0.01
        %v2195 = vsel %vm2193, %v2191, %v2194
        %v2196 = vld [vmem:[%s12] sm:$0xff]
        %v2197 = vld [vmem:[%s12 + $0x8] sm:$0xff]
        %v2198 = vld [vmem:[%s12 + $0x10] sm:$0xff]
        %v2199 = vld [vmem:[%s12 + $0x18] sm:$0xff]
        %v2200 = vld [vmem:[%s12 + $0x20] sm:$0xff]
        %v2201 = vld [vmem:[%s12 + $0x28] sm:$0xff]
        %v2202 = vld [vmem:[%s12 + $0x30] sm:$0xff]
        %v2203 = vld [vmem:[%s12 + $0x38] sm:$0xff]
        %v2204 = vld [vmem:[%s12 + $0x40] sm:$0xff]
        %v2205 = vld [vmem:[%s12 + $0x48] sm:$0xff]
        %v2206 = vld [vmem:[%s12 + $0x50] sm:$0xff]
        %v2207 = vld [vmem:[%s12 + $0x58] sm:$0xff]
        %v2208 = vld [vmem:[%s12 + $0x60] sm:$0xff]
        %v2209 = vld [vmem:[%s12 + $0x68] sm:$0xff]
        %v2210 = vld [vmem:[%s12 + $0x70] sm:$0xff]
        %v2211 = vld [vmem:[%s12 + $0x78] sm:$0xff]
        %v2212 = vld [vmem:[%s13] sm:$0x1]
        %2213 = vmatpush.msra.mxu0 %v2211
        %2214 = vmatpush.msra.mxu0 %v2210
        %2215 = vmatpush.msra.mxu0 %v2209
        %2216 = vmatpush.msra.mxu0 %v2208
        %2217 = vmatpush.msra.mxu0 %v2207
        %2218 = vmatpush.msra.mxu0 %v2206
        %2219 = vmatpush.msra.mxu0 %v2205
        %2220 = vmatpush.msra.mxu0 %v2204
        %2221 = vmatpush.msra.mxu0 %v2203
        %2222 = vmatpush.msra.mxu0 %v2202
        %2223 = vmatpush.msra.mxu0 %v2201
        %2224 = vmatpush.msra.mxu0 %v2200
        %2225 = vmatpush.msra.mxu0 %v2199
        %2226 = vmatpush.msra.mxu0 %v2198
        %2227 = vmatpush.msra.mxu0 %v2197
        %2228 = vmatpush.msra.mxu0 %v2196
        %2229 = vmatmul.f32.gmra.mxu0 %v2195
        %v2230 = vpop.f32.mrf.mxu0
        %v2231 = vadd.f32 %v2212, %v2230
        %2232 = vdwg.mxu0
        %2233 = vst [vmem:[%s459] sm:$0x1] %v2231
        %s2234 = sand.u32 %s335, 1
        %s2235 = scalar_lea.sflag [#allocation3], %s2234
        %s2236 = sand.u32 %s335, 1
        %s2237 = scalar_lea.vmem [#allocation2], %s2236
        // Predicated region
        $region77: #{gradual_style_block_pallas.1} parent=75 // pred_check
          %p2238 = pneg %p345
        $region78: #{gradual_style_block_pallas.1} parent=75 // pred_check_branch
          %2240 = sbr.rel (%p2238) target = $region80
        $region79: #{gradual_style_block_pallas.1} parent=75 // pred_region
          %2242 = vsyncadd %s2235, 0
          %s2243 = scalar_lea.hbm %s14, %s28
          %s2245 = sshll.u32 %s2237, 4
          %s2246 = int_to_ptr.vmem [resolvable:$true] %s2245
          %s2247 = sshll.u32 %s2243, 4
          %s2248 = int_to_ptr.hbm [resolvable:$true] %s2247
          %2250 = dma.vmem_to_hbm [thread:$0]  %s2246, 16, %s2248, %s2235
        $region80: #{gradual_style_block_pallas.1} parent=75 // pred_fallthru
          _
      $region76: #{gradual_style_block_pallas.1} parent=5 // pred_fallthru
        _
      %p2251 = scmp.le.s32.totalorder 2, %s23
      // Predicated region
      $region81: #{gradual_style_block_pallas.1} parent=5 // pred_check
        %p2252 = pneg %p2251
      $region82: #{gradual_style_block_pallas.1} parent=5 // pred_check_branch
        %2254 = sbr.rel (%p2252) target = $region84
      $region83: #{gradual_style_block_pallas.1} parent=5 // pred_region
        %s2255 = ssub.s32 %s23, 2
        // Predicated region
        $region85: #{gradual_style_block_pallas.1} parent=83 // pred_check
          %p2256 = pneg %p351
        $region86: #{gradual_style_block_pallas.1} parent=83 // pred_check_branch
          %2258 = sbr.rel (%p2256) target = $region88
        $region87: #{gradual_style_block_pallas.1} parent=83 // pred_region
          %s2259 = sand.u32 %s336, 1
          %s2260 = scalar_lea.sflag [#allocation3], %s2259
          %s2261 = sand.u32 %s336, 1
          %s2262 = scalar_lea.vmem [#allocation2], %s2261
          %2264 = dma.done %s2260, 16
        $region88: #{gradual_style_block_pallas.1} parent=83 // pred_fallthru
          _
      $region84: #{gradual_style_block_pallas.1} parent=5 // pred_fallthru
        _
    $region6: #{gradual_style_block_pallas.1} parent=1 // loop_footer
      %s27 = sadd.s32 1, %s23
    $region7: #{gradual_style_block_pallas.1} parent=1 // loop_footer_branch
      %22 = sbr.rel target = $region3
    $region8: #{gradual_style_block_pallas.1} parent=1 // loop_exit
      _
    %2265 = vsyncpa [#allocation3], 1
    %s2266 = scalar_lea.sflag [#allocation3], 1
    %2267 = vsyncpa %s2266, 1

</llo_original>
